<compile_context>
chip_gen: v6e
topology: v6e:2x2x1
jax: 0.10.0
libtpu: 0.0.40
codegen_flags: <defaults>
</compile_context>

<pallas_src>
import functools

import jax
import jax.numpy as jnp
from jax import lax
from jax.experimental import pallas as pl
from jax.experimental.pallas import tpu as pltpu

_EPS = 1e-5
_LANE = 128
_SP_ALIGN = 512          # flat spatial axis rounded to this -> lane tiles >= 512


# ----------------------------------------------------------------------------------
# layout helpers: NCHW <-> channel-major "strided-flat" spatial layout
# ----------------------------------------------------------------------------------
def _round_up(a, b):
    return (a + b - 1) // b * b


def _pick_tile(sp, max_tile=1024):
    """Largest multiple of 128 dividing sp, capped at max_tile (sp is 512-aligned)."""
    best, t = _LANE, _LANE
    while t <= min(sp, max_tile):
        if sp % t == 0:
            best = t
        t += _LANE
    return best


def _to_padded_flat(x, H, W, Wp, front, sp):
    """(N, C, H, W) -> (N, C, sp); pixel (h, w) at lane front + h*Wp + w, zeros elsewhere."""
    n, c = x.shape[0], x.shape[1]
    xp = jnp.pad(x, ((0, 0), (0, 0), (0, 0), (0, Wp - W)))      # per-row gap columns
    flat = xp.reshape(n, c, H * Wp)
    return jnp.pad(flat, ((0, 0), (0, 0), (front, sp - front - H * Wp)))


def _from_padded_flat(y, H, W, Wp, front):
    n, c, _ = y.shape
    core = y[:, :, front:front + H * Wp].reshape(n, c, H, Wp)
    return core[:, :, :, :W]


def _fold_conv_bn(w, bn):
    """Fold eval-mode BatchNorm into conv weight + bias."""
    s = bn["g"] * lax.rsqrt(bn["rv"] + _EPS)
    return w * s[:, None, None, None], bn["b"] - bn["rm"] * s


def _leaky(v):
    return jnp.maximum(v, 0.1 * v)      # LeakyReLU(0.1): one mul + one max


# ----------------------------------------------------------------------------------
# Kernel A (only used when repeats == 0): 1x1 conv + folded BN + LeakyReLU
# ----------------------------------------------------------------------------------
def _pointwise_kernel(x_ref, w_ref, b_ref, o_ref):
    acc = jnp.dot(w_ref[...], x_ref[0], preferred_element_type=jnp.float32) + b_ref[...]
    o_ref[0] = _leaky(acc).astype(o_ref.dtype)


def _pointwise_call(x_flat, w, b, ts):
    n, cin, sp = x_flat.shape
    cout = w.shape[0]
    return pl.pallas_call(
        _pointwise_kernel,
        out_shape=jax.ShapeDtypeStruct((n, cout, sp), x_flat.dtype),
        grid_spec=pltpu.PrefetchScalarGridSpec(
            num_scalar_prefetch=0,
            grid=(n, sp // ts),
            in_specs=[
                pl.BlockSpec((1, cin, ts), lambda i, s: (i, 0, s)),
                pl.BlockSpec((cout, cin), lambda i, s: (0, 0)),
                pl.BlockSpec((cout, 1), lambda i, s: (0, 0)),
            ],
            out_specs=pl.BlockSpec((1, cout, ts), lambda i, s: (i, 0, s)),
        ),
        compiler_params=pltpu.CompilerParams(
            dimension_semantics=("parallel", "parallel")),
    )(x_flat, w, b)


# ----------------------------------------------------------------------------------
# Kernel B: CSP cv1 + the whole Bottleneck chain, fully fused (one call per image).
#   a = leaky(cv1_w @ x + cv1_b)                       (CSP cv1, kept in f32 VMEM)
#   repeat R times:
#     h   = leaky(w1 @ a + b1), zero-padding ring restored with a select
#     y   = leaky(W2(ch,9chp) @ im2col(h)(9chp,sp) + b2)    (3x3 as ONE MXU matmul)
#     a   = select(valid, y (+ a), 0)
#   out = a
# ----------------------------------------------------------------------------------
def _chain_kernel(x_ref, cw_ref, cb_ref, m_ref, w1_ref, b1_ref, w2_ref, b2_ref,
                  o_ref, a_scr, col_scr, *, Wp, front, L, repeats, shortcut):
    ch = o_ref.shape[1]            # hidden channels (un-padded)
    chp = w1_ref.shape[1]          # hidden channels padded to a multiple of 8
    cdt = col_scr.dtype
    valid = m_ref[...] != 0.0      # (1, sp) — select (NOT multiply): no NaN leakage

    # CSP cv1: 1x1 conv + folded BN + LeakyReLU; chain stays in f32 VMEM
    a = jnp.dot(cw_ref[...], x_ref[0], preferred_element_type=jnp.float32) + cb_ref[...]
    a_scr[...] = jnp.where(valid, _leaky(a), 0.0)

    c0 = 4 * chp                   # im2col band of the center tap (dh=1, dw=1, off=0)
    for r in range(repeats):
        # Bottleneck.cv1 (1x1 + BN + act); padding ring/gap lanes forced back to zero
        h = jnp.dot(w1_ref[r], a_scr[...].astype(cdt),
                    preferred_element_type=jnp.float32) + b1_ref[r]
        hb = jnp.where(valid, _leaky(h), 0.0).astype(cdt)          # (chp, sp)

        # Bottleneck.cv2 (3x3): build the im2col scratch once (9 shifted windows),
        # then a single (ch, 9*chp) x (9*chp, sp) MXU matmul.
        col_scr[c0:c0 + chp, :] = hb                               # center tap, full lanes
        for t in range(9):
            if t == 4:
                continue
            dh, dw = divmod(t, 3)
            off = (dh - 1) * Wp + (dw - 1)                         # static lane offset
            col_scr[t * chp:(t + 1) * chp, front:front + L] = \
                col_scr[c0:c0 + chp, front + off:front + off + L]
        y = jnp.dot(w2_ref[r], col_scr[...],
                    preferred_element_type=jnp.float32) + b2_ref[r]
        y = _leaky(y)
        if shortcut:
            y = y + a_scr[...]                                     # residual in f32
        # lanes outside the valid pixel set may hold garbage (uninitialised im2col
        # strips) -> select them to 0 so the output is fully defined.
        a_scr[...] = jnp.where(valid, y, 0.0)

    o_ref[0] = a_scr[...].astype(o_ref.dtype)                      # single full store


def _chain_call(x_flat, cv1w, cv1b, mask, w1s, b1s, w2s, b2s, *,
                Wp, front, L, shortcut):
    n, cin, sp = x_flat.shape
    R, chp, ch = w1s.shape
    kern = functools.partial(_chain_kernel, Wp=Wp, front=front, L=L,
                             repeats=R, shortcut=shortcut)

    # explicit VMEM budget (scoped default: 16 MiB on v5e, 32 MiB on v6e/v7x)
    est = (ch * sp * 4                       # f32 running activation scratch
           + 9 * chp * sp * 2                # bf16 im2col scratch
           + 2 * 2 * (cin + ch) * sp         # double-buffered in/out bf16 slabs
           + 2 * 2 * R * 10 * chp * chp      # stacked per-repeat weights
           + (1 << 20))
    vmem_limit = int(min(max(est * 5 // 4, 32 << 20), 120 << 20))

    return pl.pallas_call(
        kern,
        out_shape=jax.ShapeDtypeStruct((n, ch, sp), x_flat.dtype),
        grid_spec=pltpu.PrefetchScalarGridSpec(
            num_scalar_prefetch=0,
            grid=(n,),
            in_specs=[
                pl.BlockSpec((1, cin, sp), lambda i: (i, 0, 0)),
                pl.BlockSpec((ch, cin), lambda i: (0, 0)),
                pl.BlockSpec((ch, 1), lambda i: (0, 0)),
                pl.BlockSpec((1, sp), lambda i: (0, 0)),
                pl.BlockSpec((R, chp, ch), lambda i: (0, 0, 0)),
                pl.BlockSpec((R, chp, 1), lambda i: (0, 0, 0)),
                pl.BlockSpec((R, ch, 9 * chp), lambda i: (0, 0, 0)),
                pl.BlockSpec((R, ch, 1), lambda i: (0, 0, 0)),
            ],
            out_specs=pl.BlockSpec((1, ch, sp), lambda i: (i, 0, 0)),
            scratch_shapes=[
                pltpu.VMEM((ch, sp), jnp.float32),          # running activation (f32)
                pltpu.VMEM((9 * chp, sp), x_flat.dtype),    # im2col scratch (bf16)
            ],
        ),
        compiler_params=pltpu.CompilerParams(
            dimension_semantics=("parallel",),
            vmem_limit_bytes=vmem_limit),
    )(x_flat, cv1w, cv1b, mask, w1s, b1s, w2s, b2s)


# ----------------------------------------------------------------------------------
# Kernel C: CSP head — cv3, cv2, concat + BN + act, cv4 + BN + act, all fused.
# The channel concat lives only in a VMEM scratch and feeds one (cout, 2ch) matmul.
# ----------------------------------------------------------------------------------
def _head_kernel(a_ref, x_ref, w3_ref, b3_ref, w2_ref, b2_ref, w4_ref, b4_ref,
                 o_ref, z_scr):
    chp = w3_ref.shape[0]
    z1 = jnp.dot(w3_ref[...], a_ref[0], preferred_element_type=jnp.float32) + b3_ref[...]
    z2 = jnp.dot(w2_ref[...], x_ref[0], preferred_element_type=jnp.float32) + b2_ref[...]
    z_scr[:chp, :] = _leaky(z1).astype(z_scr.dtype)
    z_scr[chp:, :] = _leaky(z2).astype(z_scr.dtype)
    o = jnp.dot(w4_ref[...], z_scr[...], preferred_element_type=jnp.float32) + b4_ref[...]
    o_ref[0] = _leaky(o).astype(o_ref.dtype)


def _head_call(a_flat, x_flat, w3, b3, w2, b2, w4, b4, ts):
    n, ch, sp = a_flat.shape
    cin = x_flat.shape[1]
    chp = w3.shape[0]
    cout = w4.shape[0]
    cst = lambda i, s: (0, 0)
    return pl.pallas_call(
        _head_kernel,
        out_shape=jax.ShapeDtypeStruct((n, cout, sp), a_flat.dtype),
        grid_spec=pltpu.PrefetchScalarGridSpec(
            num_scalar_prefetch=0,
            grid=(n, sp // ts),
            in_specs=[
                pl.BlockSpec((1, ch, ts), lambda i, s: (i, 0, s)),
                pl.BlockSpec((1, cin, ts), lambda i, s: (i, 0, s)),
                pl.BlockSpec((chp, ch), cst),
                pl.BlockSpec((chp, 1), cst),
                pl.BlockSpec((chp, cin), cst),
                pl.BlockSpec((chp, 1), cst),
                pl.BlockSpec((cout, 2 * chp), cst),
                pl.BlockSpec((cout, 1), cst),
            ],
            out_specs=pl.BlockSpec((1, cout, ts), lambda i, s: (i, 0, s)),
            scratch_shapes=[pltpu.VMEM((2 * chp, ts), a_flat.dtype)],
        ),
        compiler_params=pltpu.CompilerParams(
            dimension_semantics=("parallel", "parallel")),
    )(a_flat, x_flat, w3, b3, w2, b2, w4, b4)


# ----------------------------------------------------------------------------------
# BottleneckCSP forward (eval-mode BN), equivalent to the PyTorch module
# ----------------------------------------------------------------------------------
@functools.partial(jax.jit, static_argnames=("shortcut", "compute_dtype"))
def bottleneck_csp_forward(x, params, shortcut=True, compute_dtype=jnp.bfloat16):
    n, cin, H, W = x.shape
    ch = params["cv3"]["w"].shape[0]
    chp = _round_up(ch, 8)                 # aligned hidden dim for in-kernel slices
    cdt = compute_dtype

    Wp = W + 2
    front = _round_up(Wp + 1, _LANE)
    L = H * Wp
    sp = _round_up(front + (H + 1) * Wp + 1, _SP_ALIGN)
    ts = _pick_tile(sp)

    x_flat = _to_padded_flat(x, H, W, Wp, front, sp).astype(cdt)
    mask = _to_padded_flat(jnp.ones((1, 1, H, W), jnp.float32), H, W, Wp, front, sp)
    mask = mask.reshape(1, sp)

    def f32col(v, rows=None):
        v = v.reshape(-1)
        if rows is not None and rows > v.shape[0]:
            v = jnp.pad(v, (0, rows - v.shape[0]))
        return v[:, None].astype(jnp.float32)

    # ---- CSP cv1 + Bottleneck chain: one fused kernel ----
    w1, b1 = _fold_conv_bn(params["cv1"]["w"], params["cv1"]["bn"])
    repeats = len(params["m"])
    if repeats == 0:
        a = _pointwise_call(x_flat, w1[:, :, 0, 0].astype(cdt), f32col(b1), ts)
    else:
        w1s, b1s, w2s, b2s = [], [], [], []
        for blk in params["m"]:
            bw1, bb1 = _fold_conv_bn(blk["cv1"]["w"], blk["cv1"]["bn"])
            bw2, bb2 = _fold_conv_bn(blk["cv2"]["w"], blk["cv2"]["bn"])
            w1s.append(jnp.pad(bw1[:, :, 0, 0], ((0, chp - ch), (0, 0))))
            b1s.append(jnp.pad(bb1, (0, chp - ch))[:, None])
            # (co, ci, 3, 3) -> (co, 9*chp): column t*chp + ci holds tap t = dh*3 + dw
            t9 = jnp.pad(jnp.transpose(bw2, (0, 2, 3, 1)),
                         ((0, 0), (0, 0), (0, 0), (0, chp - ch)))
            w2s.append(t9.reshape(ch, 9 * chp))
            b2s.append(bb2[:, None])
        a = _chain_call(
            x_flat, w1[:, :, 0, 0].astype(cdt), f32col(b1), mask,
            jnp.stack(w1s).astype(cdt), jnp.stack(b1s).astype(jnp.float32),
            jnp.stack(w2s).astype(cdt), jnp.stack(b2s).astype(jnp.float32),
            Wp=Wp, front=front, L=L, shortcut=shortcut)

    # ---- head: cv3 / cv2 / cat+BN+act / cv4+BN+act, one fused kernel ----
    s_cat = params["bn"]["g"] * lax.rsqrt(params["bn"]["rv"] + _EPS)
    b_cat = params["bn"]["b"] - params["bn"]["rm"] * s_cat
    w3 = jnp.pad(params["cv3"]["w"][:, :, 0, 0] * s_cat[:ch, None],
                 ((0, chp - ch), (0, 0))).astype(cdt)
    w2h = jnp.pad(params["cv2"]["w"][:, :, 0, 0] * s_cat[ch:, None],
                  ((0, chp - ch), (0, 0))).astype(cdt)
    w4, b4 = _fold_conv_bn(params["cv4"]["w"], params["cv4"]["bn"])
    w4 = w4[:, :, 0, 0]
    cout = w4.shape[0]
    w4p = jnp.zeros((cout, 2 * chp), w4.dtype)
    w4p = w4p.at[:, :ch].set(w4[:, :ch]).at[:, chp:chp + ch].set(w4[:, ch:]).astype(cdt)
    out_flat = _head_call(a, x_flat,
                          w3, f32col(b_cat[:ch], chp),
                          w2h, f32col(b_cat[ch:], chp),
                          w4p, f32col(b4), ts)

    out = _from_padded_flat(out_flat, H, W, Wp, front)
    return out.astype(x.dtype)


# ----------------------------------------------------------------------------------
# pure-XLA f32 reference (mirrors the PyTorch module, eval-mode BN)
# ----------------------------------------------------------------------------------
def _bn_eval(v, bn):
    s = bn["g"] * lax.rsqrt(bn["rv"] + _EPS)
    return v * s[None, :, None, None] + (bn["b"] - bn["rm"] * s)[None, :, None, None]


def _conv2d(v, w, pad):
    return lax.conv_general_dilated(v, w, (1, 1), ((pad, pad), (pad, pad)),
                                    dimension_numbers=("NCHW", "OIHW", "NCHW"))


def reference_bottleneck_csp(x, p, shortcut=True):
    def conv_mod(v, q, pad):
        return _leaky(_bn_eval(_conv2d(v, q["w"], pad), q["bn"]))
    a = conv_mod(x, p["cv1"], 0)
    for blk in p["m"]:
        b = conv_mod(a, blk["cv1"], 0)
        c = conv_mod(b, blk["cv2"], 1)
        a = a + c if shortcut else c
    y1 = _conv2d(a, p["cv3"]["w"], 0)
    y2 = _conv2d(x, p["cv2"]["w"], 0)
    z = _leaky(_bn_eval(jnp.concatenate([y1, y2], axis=1), p["bn"]))
    return conv_mod(z, p["cv4"], 0)


def init_params(key, cin, cout, repeats, expansion=0.5):
    ch = int(cout * expansion)

    def conv_w(k, co, ci, ks):
        return jax.random.normal(k, (co, ci, ks, ks), jnp.float32) / float(ci * ks * ks) ** 0.5

    def bn_p(k, c):
        k1, k2, k3, k4 = jax.random.split(k, 4)
        return dict(g=1.0 + 0.1 * jax.random.normal(k1, (c,), jnp.float32),
                    b=0.1 * jax.random.normal(k2, (c,), jnp.float32),
                    rm=0.2 * jax.random.normal(k3, (c,), jnp.float32),
                    rv=0.5 + jax.random.uniform(k4, (c,), jnp.float32))

    keys = jax.random.split(key, 8 + 4 * repeats)
    p = dict(
        cv1=dict(w=conv_w(keys[0], ch, cin, 1), bn=bn_p(keys[1], ch)),
        cv2=dict(w=conv_w(keys[2], ch, cin, 1)),
        cv3=dict(w=conv_w(keys[3], ch, ch, 1)),
        cv4=dict(w=conv_w(keys[4], cout, 2 * ch, 1), bn=bn_p(keys[5], cout)),
        bn=bn_p(keys[6], 2 * ch),
        m=[],
    )
    ki = 7
    for _ in range(repeats):
        p["m"].append(dict(
            cv1=dict(w=conv_w(keys[ki], ch, ch, 1), bn=bn_p(keys[ki + 1], ch)),
            cv2=dict(w=conv_w(keys[ki + 2], ch, ch, 3), bn=bn_p(keys[ki + 3], ch)),
        ))
        ki += 4
    return p


if __name__ == "__main__":
    key = jax.random.PRNGKey(0)
    N, Cin, H, W = 2, 4, 16, 16          # BottleneckCSP(in_channel=4, out_channel=8)
    Cout, repeats = 8, 2
    params = init_params(key, Cin, Cout, repeats)
    x = jax.random.normal(jax.random.fold_in(key, 1234), (N, Cin, H, W), jnp.float32)

    out = bottleneck_csp_forward(x, params)
    out = jax.block_until_ready(out)

    ref = reference_bottleneck_csp(x, params)
    assert out.shape == (N, Cout, H, W), out.shape

    err = jnp.abs(out.astype(jnp.float32) - ref)
    denom = float(jnp.max(jnp.abs(ref))) + 1e-6
    max_rel = float(jnp.max(err)) / denom
    mean_rel = float(jnp.mean(err)) / denom
    # bf16 activations/weights (f32 MXU accumulation, f32 residual chain) vs f32 ref.
    assert max_rel < 8e-2 and mean_rel < 2e-2, (max_rel, mean_rel)
    print("KERNEL_OK")
</pallas_src>

<mosaic_0001>
module attributes {stable_mosaic.version = 11 : i64} {
  func.func @_head_kernel(%arg0: i32, %arg1: i32, %arg2: memref<1x4x512xbf16, #tpu.memory_space<vmem>>, %arg3: memref<1x4x512xbf16, #tpu.memory_space<vmem>>, %arg4: memref<8x4xbf16, #tpu.memory_space<vmem>>, %arg5: memref<8x1xf32, #tpu.memory_space<vmem>>, %arg6: memref<8x4xbf16, #tpu.memory_space<vmem>>, %arg7: memref<8x1xf32, #tpu.memory_space<vmem>>, %arg8: memref<8x16xbf16, #tpu.memory_space<vmem>>, %arg9: memref<8x1xf32, #tpu.memory_space<vmem>>, %arg10: memref<1x8x512xbf16, #tpu.memory_space<vmem>>, %arg11: memref<16x512xbf16, #tpu.memory_space<vmem>>) attributes {dimension_semantics = [#tpu.dimension_semantics<parallel>, #tpu.dimension_semantics<parallel>], iteration_bounds = array<i64: 2, 1>, scalar_prefetch = 0 : i64, scratch_operands = 1 : i64, tpu.core_type = #tpu.core_type<tc>, window_params = [{transform_indices = @transform_0, window_bounds = array<i64: 1, 4, 512>}, {transform_indices = @transform_1, window_bounds = array<i64: 1, 4, 512>}, {pipeline_mode = #tpu.pipeline_mode<synchronous>, transform_indices = @transform_2, window_bounds = array<i64: 8, 4>}, {pipeline_mode = #tpu.pipeline_mode<synchronous>, transform_indices = @transform_3, window_bounds = array<i64: 8, 1>}, {pipeline_mode = #tpu.pipeline_mode<synchronous>, transform_indices = @transform_4, window_bounds = array<i64: 8, 4>}, {pipeline_mode = #tpu.pipeline_mode<synchronous>, transform_indices = @transform_5, window_bounds = array<i64: 8, 1>}, {pipeline_mode = #tpu.pipeline_mode<synchronous>, transform_indices = @transform_6, window_bounds = array<i64: 8, 16>}, {pipeline_mode = #tpu.pipeline_mode<synchronous>, transform_indices = @transform_7, window_bounds = array<i64: 8, 1>}, {transform_indices = @transform_8, window_bounds = array<i64: 1, 8, 512>}]} {
    %c0 = arith.constant 0 : index
    %c0_0 = arith.constant 0 : index
    %0 = vector.load %arg4[%c0, %c0_0] : memref<8x4xbf16, #tpu.memory_space<vmem>>, vector<8x4xbf16>
    %c0_1 = arith.constant 0 : index
    %c0_2 = arith.constant 0 : index
    %c0_3 = arith.constant 0 : index
    %1 = vector.load %arg2[%c0_1, %c0_2, %c0_3] : memref<1x4x512xbf16, #tpu.memory_space<vmem>>, vector<1x4x512xbf16>
    %2 = vector.shape_cast %1 : vector<1x4x512xbf16> to vector<4x512xbf16>
    %cst = arith.constant dense<0.000000e+00> : vector<8x512xf32>
    %3 = tpu.matmul %0, %2, %cst {dimension_numbers = #tpu.dot_dimension_numbers<[1], [0], [0], [1], [0, 0, 1, 1], [], []>} : vector<8x4xbf16>, vector<4x512xbf16>, vector<8x512xf32> -> vector<8x512xf32>
    %c0_4 = arith.constant 0 : index
    %c0_5 = arith.constant 0 : index
    %4 = vector.load %arg5[%c0_4, %c0_5] : memref<8x1xf32, #tpu.memory_space<vmem>>, vector<8x1xf32>
    %5 = vector.broadcast %4 : vector<8x1xf32> to vector<8x512xf32>
    %6 = arith.addf %3, %5 : vector<8x512xf32>
    %c0_6 = arith.constant 0 : index
    %c0_7 = arith.constant 0 : index
    %7 = vector.load %arg6[%c0_6, %c0_7] : memref<8x4xbf16, #tpu.memory_space<vmem>>, vector<8x4xbf16>
    %c0_8 = arith.constant 0 : index
    %c0_9 = arith.constant 0 : index
    %c0_10 = arith.constant 0 : index
    %8 = vector.load %arg3[%c0_8, %c0_9, %c0_10] : memref<1x4x512xbf16, #tpu.memory_space<vmem>>, vector<1x4x512xbf16>
    %9 = vector.shape_cast %8 : vector<1x4x512xbf16> to vector<4x512xbf16>
    %cst_11 = arith.constant dense<0.000000e+00> : vector<8x512xf32>
    %10 = tpu.matmul %7, %9, %cst_11 {dimension_numbers = #tpu.dot_dimension_numbers<[1], [0], [0], [1], [0, 0, 1, 1], [], []>} : vector<8x4xbf16>, vector<4x512xbf16>, vector<8x512xf32> -> vector<8x512xf32>
    %c0_12 = arith.constant 0 : index
    %c0_13 = arith.constant 0 : index
    %11 = vector.load %arg7[%c0_12, %c0_13] : memref<8x1xf32, #tpu.memory_space<vmem>>, vector<8x1xf32>
    %12 = vector.broadcast %11 : vector<8x1xf32> to vector<8x512xf32>
    %13 = arith.addf %10, %12 : vector<8x512xf32>
    %cst_14 = arith.constant 1.000000e-01 : f32
    %14 = vector.broadcast %cst_14 : f32 to vector<8x512xf32>
    %15 = arith.mulf %14, %6 : vector<8x512xf32>
    %16 = arith.maximumf %6, %15 : vector<8x512xf32>
    %17 = arith.truncf %16 : vector<8x512xf32> to vector<8x512xbf16>
    %c0_15 = arith.constant 0 : index
    %c0_16 = arith.constant 0 : index
    %18 = vector.load %arg11[%c0_15, %c0_16] : memref<16x512xbf16, #tpu.memory_space<vmem>>, vector<8x512xbf16>
    tpu.vector_store %arg11[%c0_15, %c0_16], %17 {strides = array<i32>} : memref<16x512xbf16, #tpu.memory_space<vmem>>, vector<8x512xbf16>,
    %cst_17 = arith.constant 1.000000e-01 : f32
    %19 = vector.broadcast %cst_17 : f32 to vector<8x512xf32>
    %20 = arith.mulf %19, %13 : vector<8x512xf32>
    %21 = arith.maximumf %13, %20 : vector<8x512xf32>
    %22 = arith.truncf %21 : vector<8x512xf32> to vector<8x512xbf16>
    %c8 = arith.constant 8 : index
    %c0_18 = arith.constant 0 : index
    %23 = vector.load %arg11[%c8, %c0_18] : memref<16x512xbf16, #tpu.memory_space<vmem>>, vector<8x512xbf16>
    tpu.vector_store %arg11[%c8, %c0_18], %22 {strides = array<i32>} : memref<16x512xbf16, #tpu.memory_space<vmem>>, vector<8x512xbf16>,
    %c0_19 = arith.constant 0 : index
    %c0_20 = arith.constant 0 : index
    %24 = vector.load %arg8[%c0_19, %c0_20] : memref<8x16xbf16, #tpu.memory_space<vmem>>, vector<8x16xbf16>
    %c0_21 = arith.constant 0 : index
    %c0_22 = arith.constant 0 : index
    %25 = vector.load %arg11[%c0_21, %c0_22] : memref<16x512xbf16, #tpu.memory_space<vmem>>, vector<16x512xbf16>
    %cst_23 = arith.constant dense<0.000000e+00> : vector<8x512xf32>
    %26 = tpu.matmul %24, %25, %cst_23 {dimension_numbers = #tpu.dot_dimension_numbers<[1], [0], [0], [1], [0, 0, 1, 1], [], []>} : vector<8x16xbf16>, vector<16x512xbf16>, vector<8x512xf32> -> vector<8x512xf32>
    %c0_24 = arith.constant 0 : index
    %c0_25 = arith.constant 0 : index
    %27 = vector.load %arg9[%c0_24, %c0_25] : memref<8x1xf32, #tpu.memory_space<vmem>>, vector<8x1xf32>
    %28 = vector.broadcast %27 : vector<8x1xf32> to vector<8x512xf32>
    %29 = arith.addf %26, %28 : vector<8x512xf32>
    %cst_26 = arith.constant 1.000000e-01 : f32
    %30 = vector.broadcast %cst_26 : f32 to vector<8x512xf32>
    %31 = arith.mulf %30, %29 : vector<8x512xf32>
    %32 = arith.maximumf %29, %31 : vector<8x512xf32>
    %33 = arith.truncf %32 : vector<8x512xf32> to vector<8x512xbf16>
    %c0_27 = arith.constant 0 : index
    %c0_28 = arith.constant 0 : index
    %c0_29 = arith.constant 0 : index
    %34 = vector.load %arg10[%c0_27, %c0_28, %c0_29] : memref<1x8x512xbf16, #tpu.memory_space<vmem>>, vector<1x8x512xbf16>
    %35 = vector.shape_cast %34 : vector<1x8x512xbf16> to vector<8x512xbf16>
    %36 = vector.shape_cast %33 : vector<8x512xbf16> to vector<1x8x512xbf16>
    tpu.vector_store %arg10[%c0_27, %c0_28, %c0_29], %36 {strides = array<i32>} : memref<1x8x512xbf16, #tpu.memory_space<vmem>>, vector<1x8x512xbf16>,
    return
  }
  func.func @transform_0(%arg0: i32, %arg1: i32) -> (i32, i32, i32) {
    %c0_i32 = arith.constant 0 : i32
    %c0_i32_0 = arith.constant 0 : i32
    return %arg0, %c0_i32, %arg1 : i32, i32, i32
  }
  func.func @transform_1(%arg0: i32, %arg1: i32) -> (i32, i32, i32) {
    %c0_i32 = arith.constant 0 : i32
    %c0_i32_0 = arith.constant 0 : i32
    return %arg0, %c0_i32, %arg1 : i32, i32, i32
  }
  func.func @transform_2(%arg0: i32, %arg1: i32) -> (i32, i32) {
    %c0_i32 = arith.constant 0 : i32
    %c0_i32_0 = arith.constant 0 : i32
    %c0_i32_1 = arith.constant 0 : i32
    return %c0_i32, %c0_i32_0 : i32, i32
  }
  func.func @transform_3(%arg0: i32, %arg1: i32) -> (i32, i32) {
    %c0_i32 = arith.constant 0 : i32
    %c0_i32_0 = arith.constant 0 : i32
    %c0_i32_1 = arith.constant 0 : i32
    return %c0_i32, %c0_i32_0 : i32, i32
  }
  func.func @transform_4(%arg0: i32, %arg1: i32) -> (i32, i32) {
    %c0_i32 = arith.constant 0 : i32
    %c0_i32_0 = arith.constant 0 : i32
    %c0_i32_1 = arith.constant 0 : i32
    return %c0_i32, %c0_i32_0 : i32, i32
  }
  func.func @transform_5(%arg0: i32, %arg1: i32) -> (i32, i32) {
    %c0_i32 = arith.constant 0 : i32
    %c0_i32_0 = arith.constant 0 : i32
    %c0_i32_1 = arith.constant 0 : i32
    return %c0_i32, %c0_i32_0 : i32, i32
  }
  func.func @transform_6(%arg0: i32, %arg1: i32) -> (i32, i32) {
    %c0_i32 = arith.constant 0 : i32
    %c0_i32_0 = arith.constant 0 : i32
    %c0_i32_1 = arith.constant 0 : i32
    return %c0_i32, %c0_i32_0 : i32, i32
  }
  func.func @transform_7(%arg0: i32, %arg1: i32) -> (i32, i32) {
    %c0_i32 = arith.constant 0 : i32
    %c0_i32_0 = arith.constant 0 : i32
    %c0_i32_1 = arith.constant 0 : i32
    return %c0_i32, %c0_i32_0 : i32, i32
  }
  func.func @transform_8(%arg0: i32, %arg1: i32) -> (i32, i32, i32) {
    %c0_i32 = arith.constant 0 : i32
    %c0_i32_0 = arith.constant 0 : i32
    return %arg0, %c0_i32, %arg1 : i32, i32, i32
  }
}

module attributes {stable_mosaic.version = 11 : i64} {
  func.func @_chain_kernel(%arg0: i32, %arg1: memref<1x4x512xbf16, #tpu.memory_space<vmem>>, %arg2: memref<4x4xbf16, #tpu.memory_space<vmem>>, %arg3: memref<4x1xf32, #tpu.memory_space<vmem>>, %arg4: memref<1x512xf32, #tpu.memory_space<vmem>>, %arg5: memref<2x8x4xbf16, #tpu.memory_space<vmem>>, %arg6: memref<2x8x1xf32, #tpu.memory_space<vmem>>, %arg7: memref<2x4x72xbf16, #tpu.memory_space<vmem>>, %arg8: memref<2x4x1xf32, #tpu.memory_space<vmem>>, %arg9: memref<1x4x512xbf16, #tpu.memory_space<vmem>>, %arg10: memref<4x512xf32, #tpu.memory_space<vmem>>, %arg11: memref<72x512xbf16, #tpu.memory_space<vmem>>) attributes {dimension_semantics = [#tpu.dimension_semantics<parallel>], iteration_bounds = array<i64: 2>, scalar_prefetch = 0 : i64, scratch_operands = 2 : i64, tpu.core_type = #tpu.core_type<tc>, window_params = [{transform_indices = @transform_0, window_bounds = array<i64: 1, 4, 512>}, {pipeline_mode = #tpu.pipeline_mode<synchronous>, transform_indices = @transform_1, window_bounds = array<i64: 4, 4>}, {pipeline_mode = #tpu.pipeline_mode<synchronous>, transform_indices = @transform_2, window_bounds = array<i64: 4, 1>}, {pipeline_mode = #tpu.pipeline_mode<synchronous>, transform_indices = @transform_3, window_bounds = array<i64: 1, 512>}, {pipeline_mode = #tpu.pipeline_mode<synchronous>, transform_indices = @transform_4, window_bounds = array<i64: 2, 8, 4>}, {pipeline_mode = #tpu.pipeline_mode<synchronous>, transform_indices = @transform_5, window_bounds = array<i64: 2, 8, 1>}, {pipeline_mode = #tpu.pipeline_mode<synchronous>, transform_indices = @transform_6, window_bounds = array<i64: 2, 4, 72>}, {pipeline_mode = #tpu.pipeline_mode<synchronous>, transform_indices = @transform_7, window_bounds = array<i64: 2, 4, 1>}, {transform_indices = @transform_8, window_bounds = array<i64: 1, 4, 512>}]} {
    %c0 = arith.constant 0 : index
    %c0_0 = arith.constant 0 : index
    %0 = vector.load %arg4[%c0, %c0_0] : memref<1x512xf32, #tpu.memory_space<vmem>>, vector<1x512xf32>
    %cst = arith.constant 0.000000e+00 : f32
    %1 = vector.broadcast %cst : f32 to vector<1x512xf32>
    %2 = arith.cmpf one, %0, %1 : vector<1x512xf32>
    %c0_1 = arith.constant 0 : index
    %c0_2 = arith.constant 0 : index
    %3 = vector.load %arg2[%c0_1, %c0_2] : memref<4x4xbf16, #tpu.memory_space<vmem>>, vector<4x4xbf16>
    %c0_3 = arith.constant 0 : index
    %c0_4 = arith.constant 0 : index
    %c0_5 = arith.constant 0 : index
    %4 = vector.load %arg1[%c0_3, %c0_4, %c0_5] : memref<1x4x512xbf16, #tpu.memory_space<vmem>>, vector<1x4x512xbf16>
    %5 = vector.shape_cast %4 : vector<1x4x512xbf16> to vector<4x512xbf16>
    %cst_6 = arith.constant dense<0.000000e+00> : vector<4x512xf32>
    %6 = tpu.matmul %3, %5, %cst_6 {dimension_numbers = #tpu.dot_dimension_numbers<[1], [0], [0], [1], [0, 0, 1, 1], [], []>} : vector<4x4xbf16>, vector<4x512xbf16>, vector<4x512xf32> -> vector<4x512xf32>
    %c0_7 = arith.constant 0 : index
    %c0_8 = arith.constant 0 : index
    %7 = vector.load %arg3[%c0_7, %c0_8] : memref<4x1xf32, #tpu.memory_space<vmem>>, vector<4x1xf32>
    %8 = vector.broadcast %7 : vector<4x1xf32> to vector<4x512xf32>
    %9 = arith.addf %6, %8 : vector<4x512xf32>
    %cst_9 = arith.constant 1.000000e-01 : f32
    %10 = vector.broadcast %cst_9 : f32 to vector<4x512xf32>
    %11 = arith.mulf %10, %9 : vector<4x512xf32>
    %12 = arith.maximumf %9, %11 : vector<4x512xf32>
    %cst_10 = arith.constant 0.000000e+00 : f32
    %13 = vector.shape_cast %2 : vector<1x512xi1> to vector<1x512xi1>
    %14 = vector.broadcast %13 : vector<1x512xi1> to vector<4x512xi1>
    %15 = vector.broadcast %cst_10 : f32 to vector<4x512xf32>
    %16 = arith.select %14, %12, %15 : vector<4x512xi1>, vector<4x512xf32>
    %c0_11 = arith.constant 0 : index
    %c0_12 = arith.constant 0 : index
    %17 = vector.load %arg10[%c0_11, %c0_12] : memref<4x512xf32, #tpu.memory_space<vmem>>, vector<4x512xf32>
    tpu.vector_store %arg10[%c0_11, %c0_12], %16 {strides = array<i32>} : memref<4x512xf32, #tpu.memory_space<vmem>>, vector<4x512xf32>,
    %c0_13 = arith.constant 0 : index
    %c0_14 = arith.constant 0 : index
    %c0_15 = arith.constant 0 : index
    %18 = vector.load %arg5[%c0_13, %c0_14, %c0_15] : memref<2x8x4xbf16, #tpu.memory_space<vmem>>, vector<1x8x4xbf16>
    %19 = vector.shape_cast %18 : vector<1x8x4xbf16> to vector<8x4xbf16>
    %c0_16 = arith.constant 0 : index
    %c0_17 = arith.constant 0 : index
    %20 = vector.load %arg10[%c0_16, %c0_17] : memref<4x512xf32, #tpu.memory_space<vmem>>, vector<4x512xf32>
    %21 = arith.truncf %20 : vector<4x512xf32> to vector<4x512xbf16>
    %cst_18 = arith.constant dense<0.000000e+00> : vector<8x512xf32>
    %22 = tpu.matmul %19, %21, %cst_18 {dimension_numbers = #tpu.dot_dimension_numbers<[1], [0], [0], [1], [0, 0, 1, 1], [], []>} : vector<8x4xbf16>, vector<4x512xbf16>, vector<8x512xf32> -> vector<8x512xf32>
    %c0_19 = arith.constant 0 : index
    %c0_20 = arith.constant 0 : index
    %c0_21 = arith.constant 0 : index
    %23 = vector.load %arg6[%c0_19, %c0_20, %c0_21] : memref<2x8x1xf32, #tpu.memory_space<vmem>>, vector<1x8x1xf32>
    %24 = vector.shape_cast %23 : vector<1x8x1xf32> to vector<8x1xf32>
    %25 = vector.broadcast %24 : vector<8x1xf32> to vector<8x512xf32>
    %26 = arith.addf %22, %25 : vector<8x512xf32>
    %cst_22 = arith.constant 1.000000e-01 : f32
    %27 = vector.broadcast %cst_22 : f32 to vector<8x512xf32>
    %28 = arith.mulf %27, %26 : vector<8x512xf32>
    %29 = arith.maximumf %26, %28 : vector<8x512xf32>
    %cst_23 = arith.constant 0.000000e+00 : f32
    %30 = vector.shape_cast %2 : vector<1x512xi1> to vector<1x512xi1>
    %31 = vector.broadcast %30 : vector<1x512xi1> to vector<8x512xi1>
    %32 = vector.broadcast %cst_23 : f32 to vector<8x512xf32>
    %33 = arith.select %31, %29, %32 : vector<8x512xi1>, vector<8x512xf32>
    %34 = arith.truncf %33 : vector<8x512xf32> to vector<8x512xbf16>
    %c32 = arith.constant 32 : index
    %c0_24 = arith.constant 0 : index
    %35 = vector.load %arg11[%c32, %c0_24] : memref<72x512xbf16, #tpu.memory_space<vmem>>, vector<8x512xbf16>
    tpu.vector_store %arg11[%c32, %c0_24], %34 {strides = array<i32>} : memref<72x512xbf16, #tpu.memory_space<vmem>>, vector<8x512xbf16>,
    %c32_25 = arith.constant 32 : index
    %c109 = arith.constant 109 : index
    %36 = vector.load %arg11[%c32_25, %c109] : memref<72x512xbf16, #tpu.memory_space<vmem>>, vector<8x288xbf16>
    %c0_26 = arith.constant 0 : index
    %c128 = arith.constant 128 : index
    %37 = vector.load %arg11[%c0_26, %c128] : memref<72x512xbf16, #tpu.memory_space<vmem>>, vector<8x288xbf16>
    tpu.vector_store %arg11[%c0_26, %c128], %36 {strides = array<i32>} : memref<72x512xbf16, #tpu.memory_space<vmem>>, vector<8x288xbf16>,
    %c32_27 = arith.constant 32 : index
    %c110 = arith.constant 110 : index
    %38 = vector.load %arg11[%c32_27, %c110] : memref<72x512xbf16, #tpu.memory_space<vmem>>, vector<8x288xbf16>
    %c8 = arith.constant 8 : index
    %c128_28 = arith.constant 128 : index
    %39 = vector.load %arg11[%c8, %c128_28] : memref<72x512xbf16, #tpu.memory_space<vmem>>, vector<8x288xbf16>
    tpu.vector_store %arg11[%c8, %c128_28], %38 {strides = array<i32>} : memref<72x512xbf16, #tpu.memory_space<vmem>>, vector<8x288xbf16>,
    %c32_29 = arith.constant 32 : index
    %c111 = arith.constant 111 : index
    %40 = vector.load %arg11[%c32_29, %c111] : memref<72x512xbf16, #tpu.memory_space<vmem>>, vector<8x288xbf16>
    %c16 = arith.constant 16 : index
    %c128_30 = arith.constant 128 : index
    %41 = vector.load %arg11[%c16, %c128_30] : memref<72x512xbf16, #tpu.memory_space<vmem>>, vector<8x288xbf16>
    tpu.vector_store %arg11[%c16, %c128_30], %40 {strides = array<i32>} : memref<72x512xbf16, #tpu.memory_space<vmem>>, vector<8x288xbf16>,
    %c32_31 = arith.constant 32 : index
    %c127 = arith.constant 127 : index
    %42 = vector.load %arg11[%c32_31, %c127] : memref<72x512xbf16, #tpu.memory_space<vmem>>, vector<8x288xbf16>
    %c24 = arith.constant 24 : index
    %c128_32 = arith.constant 128 : index
    %43 = vector.load %arg11[%c24, %c128_32] : memref<72x512xbf16, #tpu.memory_space<vmem>>, vector<8x288xbf16>
    tpu.vector_store %arg11[%c24, %c128_32], %42 {strides = array<i32>} : memref<72x512xbf16, #tpu.memory_space<vmem>>, vector<8x288xbf16>,
    %c32_33 = arith.constant 32 : index
    %c129 = arith.constant 129 : index
    %44 = vector.load %arg11[%c32_33, %c129] : memref<72x512xbf16, #tpu.memory_space<vmem>>, vector<8x288xbf16>
    %c40 = arith.constant 40 : index
    %c128_34 = arith.constant 128 : index
    %45 = vector.load %arg11[%c40, %c128_34] : memref<72x512xbf16, #tpu.memory_space<vmem>>, vector<8x288xbf16>
    tpu.vector_store %arg11[%c40, %c128_34], %44 {strides = array<i32>} : memref<72x512xbf16, #tpu.memory_space<vmem>>, vector<8x288xbf16>,
    %c32_35 = arith.constant 32 : index
    %c145 = arith.constant 145 : index
    %46 = vector.load %arg11[%c32_35, %c145] : memref<72x512xbf16, #tpu.memory_space<vmem>>, vector<8x288xbf16>
    %c48 = arith.constant 48 : index
    %c128_36 = arith.constant 128 : index
    %47 = vector.load %arg11[%c48, %c128_36] : memref<72x512xbf16, #tpu.memory_space<vmem>>, vector<8x288xbf16>
    tpu.vector_store %arg11[%c48, %c128_36], %46 {strides = array<i32>} : memref<72x512xbf16, #tpu.memory_space<vmem>>, vector<8x288xbf16>,
    %c32_37 = arith.constant 32 : index
    %c146 = arith.constant 146 : index
    %48 = vector.load %arg11[%c32_37, %c146] : memref<72x512xbf16, #tpu.memory_space<vmem>>, vector<8x288xbf16>
    %c56 = arith.constant 56 : index
    %c128_38 = arith.constant 128 : index
    %49 = vector.load %arg11[%c56, %c128_38] : memref<72x512xbf16, #tpu.memory_space<vmem>>, vector<8x288xbf16>
    tpu.vector_store %arg11[%c56, %c128_38], %48 {strides = array<i32>} : memref<72x512xbf16, #tpu.memory_space<vmem>>, vector<8x288xbf16>,
    %c32_39 = arith.constant 32 : index
    %c147 = arith.constant 147 : index
    %50 = vector.load %arg11[%c32_39, %c147] : memref<72x512xbf16, #tpu.memory_space<vmem>>, vector<8x288xbf16>
    %c64 = arith.constant 64 : index
    %c128_40 = arith.constant 128 : index
    %51 = vector.load %arg11[%c64, %c128_40] : memref<72x512xbf16, #tpu.memory_space<vmem>>, vector<8x288xbf16>
    tpu.vector_store %arg11[%c64, %c128_40], %50 {strides = array<i32>} : memref<72x512xbf16, #tpu.memory_space<vmem>>, vector<8x288xbf16>,
    %c0_41 = arith.constant 0 : index
    %c0_42 = arith.constant 0 : index
    %c0_43 = arith.constant 0 : index
    %52 = vector.load %arg7[%c0_41, %c0_42, %c0_43] : memref<2x4x72xbf16, #tpu.memory_space<vmem>>, vector<1x4x72xbf16>
    %53 = vector.shape_cast %52 : vector<1x4x72xbf16> to vector<4x72xbf16>
    %c0_44 = arith.constant 0 : index
    %c0_45 = arith.constant 0 : index
    %54 = vector.load %arg11[%c0_44, %c0_45] : memref<72x512xbf16, #tpu.memory_space<vmem>>, vector<72x512xbf16>
    %cst_46 = arith.constant dense<0.000000e+00> : vector<4x512xf32>
    %55 = tpu.matmul %53, %54, %cst_46 {dimension_numbers = #tpu.dot_dimension_numbers<[1], [0], [0], [1], [0, 0, 1, 1], [], []>} : vector<4x72xbf16>, vector<72x512xbf16>, vector<4x512xf32> -> vector<4x512xf32>
    %c0_47 = arith.constant 0 : index
    %c0_48 = arith.constant 0 : index
    %c0_49 = arith.constant 0 : index
    %56 = vector.load %arg8[%c0_47, %c0_48, %c0_49] : memref<2x4x1xf32, #tpu.memory_space<vmem>>, vector<1x4x1xf32>
    %57 = vector.shape_cast %56 : vector<1x4x1xf32> to vector<4x1xf32>
    %58 = vector.broadcast %57 : vector<4x1xf32> to vector<4x512xf32>
    %59 = arith.addf %55, %58 : vector<4x512xf32>
    %cst_50 = arith.constant 1.000000e-01 : f32
    %60 = vector.broadcast %cst_50 : f32 to vector<4x512xf32>
    %61 = arith.mulf %60, %59 : vector<4x512xf32>
    %62 = arith.maximumf %59, %61 : vector<4x512xf32>
    %c0_51 = arith.constant 0 : index
    %c0_52 = arith.constant 0 : index
    %63 = vector.load %arg10[%c0_51, %c0_52] : memref<4x512xf32, #tpu.memory_space<vmem>>, vector<4x512xf32>
    %64 = arith.addf %62, %63 : vector<4x512xf32>
    %cst_53 = arith.constant 0.000000e+00 : f32
    %65 = vector.shape_cast %2 : vector<1x512xi1> to vector<1x512xi1>
    %66 = vector.broadcast %65 : vector<1x512xi1> to vector<4x512xi1>
    %67 = vector.broadcast %cst_53 : f32 to vector<4x512xf32>
    %68 = arith.select %66, %64, %67 : vector<4x512xi1>, vector<4x512xf32>
    %c0_54 = arith.constant 0 : index
    %c0_55 = arith.constant 0 : index
    %69 = vector.load %arg10[%c0_54, %c0_55] : memref<4x512xf32, #tpu.memory_space<vmem>>, vector<4x512xf32>
    tpu.vector_store %arg10[%c0_54, %c0_55], %68 {strides = array<i32>} : memref<4x512xf32, #tpu.memory_space<vmem>>, vector<4x512xf32>,
    %c1 = arith.constant 1 : index
    %c0_56 = arith.constant 0 : index
    %c0_57 = arith.constant 0 : index
    %70 = vector.load %arg5[%c1, %c0_56, %c0_57] : memref<2x8x4xbf16, #tpu.memory_space<vmem>>, vector<1x8x4xbf16>
    %71 = vector.shape_cast %70 : vector<1x8x4xbf16> to vector<8x4xbf16>
    %c0_58 = arith.constant 0 : index
    %c0_59 = arith.constant 0 : index
    %72 = vector.load %arg10[%c0_58, %c0_59] : memref<4x512xf32, #tpu.memory_space<vmem>>, vector<4x512xf32>
    %73 = arith.truncf %72 : vector<4x512xf32> to vector<4x512xbf16>
    %cst_60 = arith.constant dense<0.000000e+00> : vector<8x512xf32>
    %74 = tpu.matmul %71, %73, %cst_60 {dimension_numbers = #tpu.dot_dimension_numbers<[1], [0], [0], [1], [0, 0, 1, 1], [], []>} : vector<8x4xbf16>, vector<4x512xbf16>, vector<8x512xf32> -> vector<8x512xf32>
    %c1_61 = arith.constant 1 : index
    %c0_62 = arith.constant 0 : index
    %c0_63 = arith.constant 0 : index
    %75 = vector.load %arg6[%c1_61, %c0_62, %c0_63] : memref<2x8x1xf32, #tpu.memory_space<vmem>>, vector<1x8x1xf32>
    %76 = vector.shape_cast %75 : vector<1x8x1xf32> to vector<8x1xf32>
    %77 = vector.broadcast %76 : vector<8x1xf32> to vector<8x512xf32>
    %78 = arith.addf %74, %77 : vector<8x512xf32>
    %cst_64 = arith.constant 1.000000e-01 : f32
    %79 = vector.broadcast %cst_64 : f32 to vector<8x512xf32>
    %80 = arith.mulf %79, %78 : vector<8x512xf32>
    %81 = arith.maximumf %78, %80 : vector<8x512xf32>
    %cst_65 = arith.constant 0.000000e+00 : f32
    %82 = vector.shape_cast %2 : vector<1x512xi1> to vector<1x512xi1>
    %83 = vector.broadcast %82 : vector<1x512xi1> to vector<8x512xi1>
    %84 = vector.broadcast %cst_65 : f32 to vector<8x512xf32>
    %85 = arith.select %83, %81, %84 : vector<8x512xi1>, vector<8x512xf32>
    %86 = arith.truncf %85 : vector<8x512xf32> to vector<8x512xbf16>
    %c32_66 = arith.constant 32 : index
    %c0_67 = arith.constant 0 : index
    %87 = vector.load %arg11[%c32_66, %c0_67] : memref<72x512xbf16, #tpu.memory_space<vmem>>, vector<8x512xbf16>
    tpu.vector_store %arg11[%c32_66, %c0_67], %86 {strides = array<i32>} : memref<72x512xbf16, #tpu.memory_space<vmem>>, vector<8x512xbf16>,
    %c32_68 = arith.constant 32 : index
    %c109_69 = arith.constant 109 : index
    %88 = vector.load %arg11[%c32_68, %c109_69] : memref<72x512xbf16, #tpu.memory_space<vmem>>, vector<8x288xbf16>
    %c0_70 = arith.constant 0 : index
    %c128_71 = arith.constant 128 : index
    %89 = vector.load %arg11[%c0_70, %c128_71] : memref<72x512xbf16, #tpu.memory_space<vmem>>, vector<8x288xbf16>
    tpu.vector_store %arg11[%c0_70, %c128_71], %88 {strides = array<i32>} : memref<72x512xbf16, #tpu.memory_space<vmem>>, vector<8x288xbf16>,
    %c32_72 = arith.constant 32 : index
    %c110_73 = arith.constant 110 : index
    %90 = vector.load %arg11[%c32_72, %c110_73] : memref<72x512xbf16, #tpu.memory_space<vmem>>, vector<8x288xbf16>
    %c8_74 = arith.constant 8 : index
    %c128_75 = arith.constant 128 : index
    %91 = vector.load %arg11[%c8_74, %c128_75] : memref<72x512xbf16, #tpu.memory_space<vmem>>, vector<8x288xbf16>
    tpu.vector_store %arg11[%c8_74, %c128_75], %90 {strides = array<i32>} : memref<72x512xbf16, #tpu.memory_space<vmem>>, vector<8x288xbf16>,
    %c32_76 = arith.constant 32 : index
    %c111_77 = arith.constant 111 : index
    %92 = vector.load %arg11[%c32_76, %c111_77] : memref<72x512xbf16, #tpu.memory_space<vmem>>, vector<8x288xbf16>
    %c16_78 = arith.constant 16 : index
    %c128_79 = arith.constant 128 : index
    %93 = vector.load %arg11[%c16_78, %c128_79] : memref<72x512xbf16, #tpu.memory_space<vmem>>, vector<8x288xbf16>
    tpu.vector_store %arg11[%c16_78, %c128_79], %92 {strides = array<i32>} : memref<72x512xbf16, #tpu.memory_space<vmem>>, vector<8x288xbf16>,
    %c32_80 = arith.constant 32 : index
    %c127_81 = arith.constant 127 : index
    %94 = vector.load %arg11[%c32_80, %c127_81] : memref<72x512xbf16, #tpu.memory_space<vmem>>, vector<8x288xbf16>
    %c24_82 = arith.constant 24 : index
    %c128_83 = arith.constant 128 : index
    %95 = vector.load %arg11[%c24_82, %c128_83] : memref<72x512xbf16, #tpu.memory_space<vmem>>, vector<8x288xbf16>
    tpu.vector_store %arg11[%c24_82, %c128_83], %94 {strides = array<i32>} : memref<72x512xbf16, #tpu.memory_space<vmem>>, vector<8x288xbf16>,
    %c32_84 = arith.constant 32 : index
    %c129_85 = arith.constant 129 : index
    %96 = vector.load %arg11[%c32_84, %c129_85] : memref<72x512xbf16, #tpu.memory_space<vmem>>, vector<8x288xbf16>
    %c40_86 = arith.constant 40 : index
    %c128_87 = arith.constant 128 : index
    %97 = vector.load %arg11[%c40_86, %c128_87] : memref<72x512xbf16, #tpu.memory_space<vmem>>, vector<8x288xbf16>
    tpu.vector_store %arg11[%c40_86, %c128_87], %96 {strides = array<i32>} : memref<72x512xbf16, #tpu.memory_space<vmem>>, vector<8x288xbf16>,
    %c32_88 = arith.constant 32 : index
    %c145_89 = arith.constant 145 : index
    %98 = vector.load %arg11[%c32_88, %c145_89] : memref<72x512xbf16, #tpu.memory_space<vmem>>, vector<8x288xbf16>
    %c48_90 = arith.constant 48 : index
    %c128_91 = arith.constant 128 : index
    %99 = vector.load %arg11[%c48_90, %c128_91] : memref<72x512xbf16, #tpu.memory_space<vmem>>, vector<8x288xbf16>
    tpu.vector_store %arg11[%c48_90, %c128_91], %98 {strides = array<i32>} : memref<72x512xbf16, #tpu.memory_space<vmem>>, vector<8x288xbf16>,
    %c32_92 = arith.constant 32 : index
    %c146_93 = arith.constant 146 : index
    %100 = vector.load %arg11[%c32_92, %c146_93] : memref<72x512xbf16, #tpu.memory_space<vmem>>, vector<8x288xbf16>
    %c56_94 = arith.constant 56 : index
    %c128_95 = arith.constant 128 : index
    %101 = vector.load %arg11[%c56_94, %c128_95] : memref<72x512xbf16, #tpu.memory_space<vmem>>, vector<8x288xbf16>
    tpu.vector_store %arg11[%c56_94, %c128_95], %100 {strides = array<i32>} : memref<72x512xbf16, #tpu.memory_space<vmem>>, vector<8x288xbf16>,
    %c32_96 = arith.constant 32 : index
    %c147_97 = arith.constant 147 : index
    %102 = vector.load %arg11[%c32_96, %c147_97] : memref<72x512xbf16, #tpu.memory_space<vmem>>, vector<8x288xbf16>
    %c64_98 = arith.constant 64 : index
    %c128_99 = arith.constant 128 : index
    %103 = vector.load %arg11[%c64_98, %c128_99] : memref<72x512xbf16, #tpu.memory_space<vmem>>, vector<8x288xbf16>
    tpu.vector_store %arg11[%c64_98, %c128_99], %102 {strides = array<i32>} : memref<72x512xbf16, #tpu.memory_space<vmem>>, vector<8x288xbf16>,
    %c1_100 = arith.constant 1 : index
    %c0_101 = arith.constant 0 : index
    %c0_102 = arith.constant 0 : index
    %104 = vector.load %arg7[%c1_100, %c0_101, %c0_102] : memref<2x4x72xbf16, #tpu.memory_space<vmem>>, vector<1x4x72xbf16>
    %105 = vector.shape_cast %104 : vector<1x4x72xbf16> to vector<4x72xbf16>
    %c0_103 = arith.constant 0 : index
    %c0_104 = arith.constant 0 : index
    %106 = vector.load %arg11[%c0_103, %c0_104] : memref<72x512xbf16, #tpu.memory_space<vmem>>, vector<72x512xbf16>
    %cst_105 = arith.constant dense<0.000000e+00> : vector<4x512xf32>
    %107 = tpu.matmul %105, %106, %cst_105 {dimension_numbers = #tpu.dot_dimension_numbers<[1], [0], [0], [1], [0, 0, 1, 1], [], []>} : vector<4x72xbf16>, vector<72x512xbf16>, vector<4x512xf32> -> vector<4x512xf32>
    %c1_106 = arith.constant 1 : index
    %c0_107 = arith.constant 0 : index
    %c0_108 = arith.constant 0 : index
    %108 = vector.load %arg8[%c1_106, %c0_107, %c0_108] : memref<2x4x1xf32, #tpu.memory_space<vmem>>, vector<1x4x1xf32>
    %109 = vector.shape_cast %108 : vector<1x4x1xf32> to vector<4x1xf32>
    %110 = vector.broadcast %109 : vector<4x1xf32> to vector<4x512xf32>
    %111 = arith.addf %107, %110 : vector<4x512xf32>
    %cst_109 = arith.constant 1.000000e-01 : f32
    %112 = vector.broadcast %cst_109 : f32 to vector<4x512xf32>
    %113 = arith.mulf %112, %111 : vector<4x512xf32>
    %114 = arith.maximumf %111, %113 : vector<4x512xf32>
    %c0_110 = arith.constant 0 : index
    %c0_111 = arith.constant 0 : index
    %115 = vector.load %arg10[%c0_110, %c0_111] : memref<4x512xf32, #tpu.memory_space<vmem>>, vector<4x512xf32>
    %116 = arith.addf %114, %115 : vector<4x512xf32>
    %cst_112 = arith.constant 0.000000e+00 : f32
    %117 = vector.shape_cast %2 : vector<1x512xi1> to vector<1x512xi1>
    %118 = vector.broadcast %117 : vector<1x512xi1> to vector<4x512xi1>
    %119 = vector.broadcast %cst_112 : f32 to vector<4x512xf32>
    %120 = arith.select %118, %116, %119 : vector<4x512xi1>, vector<4x512xf32>
    %c0_113 = arith.constant 0 : index
    %c0_114 = arith.constant 0 : index
    %121 = vector.load %arg10[%c0_113, %c0_114] : memref<4x512xf32, #tpu.memory_space<vmem>>, vector<4x512xf32>
    tpu.vector_store %arg10[%c0_113, %c0_114], %120 {strides = array<i32>} : memref<4x512xf32, #tpu.memory_space<vmem>>, vector<4x512xf32>,
    %c0_115 = arith.constant 0 : index
    %c0_116 = arith.constant 0 : index
    %122 = vector.load %arg10[%c0_115, %c0_116] : memref<4x512xf32, #tpu.memory_space<vmem>>, vector<4x512xf32>
    %123 = arith.truncf %122 : vector<4x512xf32> to vector<4x512xbf16>
    %c0_117 = arith.constant 0 : index
    %c0_118 = arith.constant 0 : index
    %c0_119 = arith.constant 0 : index
    %124 = vector.load %arg9[%c0_117, %c0_118, %c0_119] : memref<1x4x512xbf16, #tpu.memory_space<vmem>>, vector<1x4x512xbf16>
    %125 = vector.shape_cast %124 : vector<1x4x512xbf16> to vector<4x512xbf16>
    %126 = vector.shape_cast %123 : vector<4x512xbf16> to vector<1x4x512xbf16>
    tpu.vector_store %arg9[%c0_117, %c0_118, %c0_119], %126 {strides = array<i32>} : memref<1x4x512xbf16, #tpu.memory_space<vmem>>, vector<1x4x512xbf16>,
    return
  }
  func.func @transform_0(%arg0: i32) -> (i32, i32, i32) {
    %c0_i32 = arith.constant 0 : i32
    %c0_i32_0 = arith.constant 0 : i32
    %c0_i32_1 = arith.constant 0 : i32
    return %arg0, %c0_i32, %c0_i32_0 : i32, i32, i32
  }
  func.func @transform_1(%arg0: i32) -> (i32, i32) {
    %c0_i32 = arith.constant 0 : i32
    %c0_i32_0 = arith.constant 0 : i32
    %c0_i32_1 = arith.constant 0 : i32
    return %c0_i32, %c0_i32_0 : i32, i32
  }
  func.func @transform_2(%arg0: i32) -> (i32, i32) {
    %c0_i32 = arith.constant 0 : i32
    %c0_i32_0 = arith.constant 0 : i32
    %c0_i32_1 = arith.constant 0 : i32
    return %c0_i32, %c0_i32_0 : i32, i32
  }
  func.func @transform_3(%arg0: i32) -> (i32, i32) {
    %c0_i32 = arith.constant 0 : i32
    %c0_i32_0 = arith.constant 0 : i32
    %c0_i32_1 = arith.constant 0 : i32
    return %c0_i32, %c0_i32_0 : i32, i32
  }
  func.func @transform_4(%arg0: i32) -> (i32, i32, i32) {
    %c0_i32 = arith.constant 0 : i32
    %c0_i32_0 = arith.constant 0 : i32
    %c0_i32_1 = arith.constant 0 : i32
    %c0_i32_2 = arith.constant 0 : i32
    return %c0_i32, %c0_i32_0, %c0_i32_1 : i32, i32, i32
  }
  func.func @transform_5(%arg0: i32) -> (i32, i32, i32) {
    %c0_i32 = arith.constant 0 : i32
    %c0_i32_0 = arith.constant 0 : i32
    %c0_i32_1 = arith.constant 0 : i32
    %c0_i32_2 = arith.constant 0 : i32
    return %c0_i32, %c0_i32_0, %c0_i32_1 : i32, i32, i32
  }
  func.func @transform_6(%arg0: i32) -> (i32, i32, i32) {
    %c0_i32 = arith.constant 0 : i32
    %c0_i32_0 = arith.constant 0 : i32
    %c0_i32_1 = arith.constant 0 : i32
    %c0_i32_2 = arith.constant 0 : i32
    return %c0_i32, %c0_i32_0, %c0_i32_1 : i32, i32, i32
  }
  func.func @transform_7(%arg0: i32) -> (i32, i32, i32) {
    %c0_i32 = arith.constant 0 : i32
    %c0_i32_0 = arith.constant 0 : i32
    %c0_i32_1 = arith.constant 0 : i32
    %c0_i32_2 = arith.constant 0 : i32
    return %c0_i32, %c0_i32_0, %c0_i32_1 : i32, i32, i32
  }
  func.func @transform_8(%arg0: i32) -> (i32, i32, i32) {
    %c0_i32 = arith.constant 0 : i32
    %c0_i32_0 = arith.constant 0 : i32
    %c0_i32_1 = arith.constant 0 : i32
    return %arg0, %c0_i32, %c0_i32_0 : i32, i32, i32
  }
}

</mosaic_0001>

<llo_original>
// kernel: bottleneck_csp_forward.3
$region0: #{bottleneck_csp_forward.3}
  #allocation0 [shape = 'u32[]', space=smem, size = 0x4, offset = 0x4, fixed_abs, tag = 'smem constant byte address 0x4 - core index']
  #allocation1 [shape = 'u32[144,128]{1,0:T(1,128)}', space=vmem, size = 0x12000, scoped, tag = 'internal scratch']
  #allocation2 [shape = 'bf16[16,512]{1,0:T(8,128)(2,1)}', space=vmem, size = 0x4000, scoped, tag = 'scratch operand']
  %s0 = inlined_call_operand.vmem [shape: bf16[2,4,512], index: 0, kind: input, shape index: {}]
  %s1 = inlined_call_operand.vmem [shape: bf16[2,4,512], index: 1, kind: input, shape index: {}]
  %s2 = inlined_call_operand.vmem [shape: bf16[8,4], index: 2, kind: input, shape index: {}]
  %s3 = inlined_call_operand.vmem [shape: f32[8,1], index: 3, kind: input, shape index: {}]
  %s4 = inlined_call_operand.vmem [shape: bf16[8,4], index: 4, kind: input, shape index: {}]
  %s5 = inlined_call_operand.vmem [shape: f32[8,1], index: 5, kind: input, shape index: {}]
  %s6 = inlined_call_operand.vmem [shape: bf16[8,16], index: 6, kind: input, shape index: {}]
  %s7 = inlined_call_operand.vmem [shape: f32[8,1], index: 7, kind: input, shape index: {}]
  %s8 = inlined_call_operand.vmem [shape: bf16[2,8,512], index: 8, kind: output, shape index: {}]
  %s9 = sld [smem:[#allocation0]]
  $region65: #{bottleneck_csp_forward.3} parent=0
    _
  %s11 = ssub.s32 1, %s9
  %s12 = scalar_select 0, %s11, %s9
  loop: start=0, step=1, limit=4
  $region2: #{bottleneck_csp_forward.3} parent=0 // loop_pre_header
    _
  $region3: #{bottleneck_csp_forward.3} parent=0 // loop_header
    %s14 = sphi 0, %s18
    %p15 = scmp.ge.s32.totalorder %s14, 4
    %s21 = sphi 0, %s33
    %s22 = sphi 0, %s29
    %s23 = sphi 0, %s21
    %s24 = sphi 0, %s22
    %s25 = sphi 0, %s23
    %s26 = sphi 0, %s24
    %s38 = sphi 0, %s40
    %s41 = sphi 0, %s38
    %s42 = sphi 0, %s41
    %s58 = sphi 0, %s42
    %s66 = sphi 0, %s68
    %s69 = sphi 0, %s66
    %s70 = sphi 0, %s69
    %s86 = sphi 0, %s70
    %s90 = sphi 0, %s90
    %s92 = sphi 0, %s90
    %s93 = sphi 0, %s92
    %s107 = sphi 0, %s93
    %s111 = sphi 0, %s111
    %s113 = sphi 0, %s111
    %s114 = sphi 0, %s113
    %s128 = sphi 0, %s114
    %s132 = sphi 0, %s132
    %s134 = sphi 0, %s132
    %s135 = sphi 0, %s134
    %s149 = sphi 0, %s135
    %s153 = sphi 0, %s153
    %s155 = sphi 0, %s153
    %s156 = sphi 0, %s155
    %s170 = sphi 0, %s156
    %s174 = sphi 0, %s174
    %s176 = sphi 0, %s174
    %s177 = sphi 0, %s176
    %s191 = sphi 0, %s177
    %s195 = sphi 0, %s195
    %s197 = sphi 0, %s195
    %s198 = sphi 0, %s197
    %s212 = sphi 0, %s198
    %s220 = sphi 0, %s222
    %s223 = sphi 0, %s220
    %s224 = sphi 0, %s223
    %s240 = sphi 0, %s224
  $region4: #{bottleneck_csp_forward.3} parent=0 // loop_header_branch
    %17 = sbr.rel (%p15) target = $region8
  $region5: #{bottleneck_csp_forward.3} parent=0 // loop_body
    %s19 = ssub.s32 %s14, 1
    %s20 = ssub.s32 %s14, 2
    %s27 = sadd.s32 1, %s22
    %p28 = scmp.ge.s32.totalorder %s27, 1
    %s29 = scalar_select %p28, 0, %s27
    %s30 = sadd.s32 1, %s21
    %s31 = scalar_select %p28, %s30, %s21
    %p32 = scmp.ge.s32.totalorder %s31, 2
    %s33 = scalar_select %p32, 0, %s31
    %s34 = ssub.s32 %s21, %s33
    %s35 = ssub.s32 %s22, %s29
    %s36 = sor.u32 %s34, %s35
    %p37 = scmp.eq.s32.totalorder %s36, 0
    %s39 = sadd.s32 %s38, 1
    %s40 = scalar_select %p37, %s38, %s39
    %p43 = pneg %p37
    %p44 = scmp.eq.s32.totalorder %s14, 1
    %p45 = por %p43, %p44
    %p46 = scmp.ne.s32.totalorder %s38, %s41
    %p47 = scmp.eq.s32.totalorder %s14, 0
    %p48 = por %p46, %p47
    %p49 = scmp.ne.s32.totalorder %s38, %s41
    %p50 = scmp.eq.s32.totalorder %s19, 1
    %p51 = por %p49, %p50
    %p52 = scmp.ne.s32.totalorder %s41, %s42
    %p53 = scmp.eq.s32.totalorder %s19, 0
    %p54 = por %p52, %p53
    %p55 = scmp.ne.s32.totalorder %s41, %s42
    %p56 = scmp.eq.s32.totalorder %s20, 1
    %p57 = por %p55, %p56
    %p59 = scmp.ne.s32.totalorder %s42, %s58
    %p60 = scmp.eq.s32.totalorder %s20, 0
    %p61 = por %p59, %p60
    %s62 = ssub.s32 %s21, %s33
    %s63 = ssub.s32 %s22, %s29
    %s64 = sor.u32 %s62, %s63
    %p65 = scmp.eq.s32.totalorder %s64, 0
    %s67 = sadd.s32 %s66, 1
    %s68 = scalar_select %p65, %s66, %s67
    %p71 = pneg %p65
    %p72 = scmp.eq.s32.totalorder %s14, 1
    %p73 = por %p71, %p72
    %p74 = scmp.ne.s32.totalorder %s66, %s69
    %p75 = scmp.eq.s32.totalorder %s14, 0
    %p76 = por %p74, %p75
    %p77 = scmp.ne.s32.totalorder %s66, %s69
    %p78 = scmp.eq.s32.totalorder %s19, 1
    %p79 = por %p77, %p78
    %p80 = scmp.ne.s32.totalorder %s69, %s70
    %p81 = scmp.eq.s32.totalorder %s19, 0
    %p82 = por %p80, %p81
    %p83 = scmp.ne.s32.totalorder %s69, %s70
    %p84 = scmp.eq.s32.totalorder %s20, 1
    %p85 = por %p83, %p84
    %p87 = scmp.ne.s32.totalorder %s70, %s86
    %p88 = scmp.eq.s32.totalorder %s20, 0
    %p89 = por %p87, %p88
    %s91 = sadd.s32 %s90, 1
    %p94 = scmp.eq.s32.totalorder %s14, 1
    %p95 = scmp.ne.s32.totalorder %s90, %s92
    %p96 = scmp.eq.s32.totalorder %s14, 0
    %p97 = por %p95, %p96
    %p98 = scmp.ne.s32.totalorder %s90, %s92
    %p99 = scmp.eq.s32.totalorder %s19, 1
    %p100 = por %p98, %p99
    %p101 = scmp.ne.s32.totalorder %s92, %s93
    %p102 = scmp.eq.s32.totalorder %s19, 0
    %p103 = por %p101, %p102
    %p104 = scmp.ne.s32.totalorder %s92, %s93
    %p105 = scmp.eq.s32.totalorder %s20, 1
    %p106 = por %p104, %p105
    %p108 = scmp.ne.s32.totalorder %s93, %s107
    %p109 = scmp.eq.s32.totalorder %s20, 0
    %p110 = por %p108, %p109
    %s112 = sadd.s32 %s111, 1
    %p115 = scmp.eq.s32.totalorder %s14, 1
    %p116 = scmp.ne.s32.totalorder %s111, %s113
    %p117 = scmp.eq.s32.totalorder %s14, 0
    %p118 = por %p116, %p117
    %p119 = scmp.ne.s32.totalorder %s111, %s113
    %p120 = scmp.eq.s32.totalorder %s19, 1
    %p121 = por %p119, %p120
    %p122 = scmp.ne.s32.totalorder %s113, %s114
    %p123 = scmp.eq.s32.totalorder %s19, 0
    %p124 = por %p122, %p123
    %p125 = scmp.ne.s32.totalorder %s113, %s114
    %p126 = scmp.eq.s32.totalorder %s20, 1
    %p127 = por %p125, %p126
    %p129 = scmp.ne.s32.totalorder %s114, %s128
    %p130 = scmp.eq.s32.totalorder %s20, 0
    %p131 = por %p129, %p130
    %s133 = sadd.s32 %s132, 1
    %p136 = scmp.eq.s32.totalorder %s14, 1
    %p137 = scmp.ne.s32.totalorder %s132, %s134
    %p138 = scmp.eq.s32.totalorder %s14, 0
    %p139 = por %p137, %p138
    %p140 = scmp.ne.s32.totalorder %s132, %s134
    %p141 = scmp.eq.s32.totalorder %s19, 1
    %p142 = por %p140, %p141
    %p143 = scmp.ne.s32.totalorder %s134, %s135
    %p144 = scmp.eq.s32.totalorder %s19, 0
    %p145 = por %p143, %p144
    %p146 = scmp.ne.s32.totalorder %s134, %s135
    %p147 = scmp.eq.s32.totalorder %s20, 1
    %p148 = por %p146, %p147
    %p150 = scmp.ne.s32.totalorder %s135, %s149
    %p151 = scmp.eq.s32.totalorder %s20, 0
    %p152 = por %p150, %p151
    %s154 = sadd.s32 %s153, 1
    %p157 = scmp.eq.s32.totalorder %s14, 1
    %p158 = scmp.ne.s32.totalorder %s153, %s155
    %p159 = scmp.eq.s32.totalorder %s14, 0
    %p160 = por %p158, %p159
    %p161 = scmp.ne.s32.totalorder %s153, %s155
    %p162 = scmp.eq.s32.totalorder %s19, 1
    %p163 = por %p161, %p162
    %p164 = scmp.ne.s32.totalorder %s155, %s156
    %p165 = scmp.eq.s32.totalorder %s19, 0
    %p166 = por %p164, %p165
    %p167 = scmp.ne.s32.totalorder %s155, %s156
    %p168 = scmp.eq.s32.totalorder %s20, 1
    %p169 = por %p167, %p168
    %p171 = scmp.ne.s32.totalorder %s156, %s170
    %p172 = scmp.eq.s32.totalorder %s20, 0
    %p173 = por %p171, %p172
    %s175 = sadd.s32 %s174, 1
    %p178 = scmp.eq.s32.totalorder %s14, 1
    %p179 = scmp.ne.s32.totalorder %s174, %s176
    %p180 = scmp.eq.s32.totalorder %s14, 0
    %p181 = por %p179, %p180
    %p182 = scmp.ne.s32.totalorder %s174, %s176
    %p183 = scmp.eq.s32.totalorder %s19, 1
    %p184 = por %p182, %p183
    %p185 = scmp.ne.s32.totalorder %s176, %s177
    %p186 = scmp.eq.s32.totalorder %s19, 0
    %p187 = por %p185, %p186
    %p188 = scmp.ne.s32.totalorder %s176, %s177
    %p189 = scmp.eq.s32.totalorder %s20, 1
    %p190 = por %p188, %p189
    %p192 = scmp.ne.s32.totalorder %s177, %s191
    %p193 = scmp.eq.s32.totalorder %s20, 0
    %p194 = por %p192, %p193
    %s196 = sadd.s32 %s195, 1
    %p199 = scmp.eq.s32.totalorder %s14, 1
    %p200 = scmp.ne.s32.totalorder %s195, %s197
    %p201 = scmp.eq.s32.totalorder %s14, 0
    %p202 = por %p200, %p201
    %p203 = scmp.ne.s32.totalorder %s195, %s197
    %p204 = scmp.eq.s32.totalorder %s19, 1
    %p205 = por %p203, %p204
    %p206 = scmp.ne.s32.totalorder %s197, %s198
    %p207 = scmp.eq.s32.totalorder %s19, 0
    %p208 = por %p206, %p207
    %p209 = scmp.ne.s32.totalorder %s197, %s198
    %p210 = scmp.eq.s32.totalorder %s20, 1
    %p211 = por %p209, %p210
    %p213 = scmp.ne.s32.totalorder %s198, %s212
    %p214 = scmp.eq.s32.totalorder %s20, 0
    %p215 = por %p213, %p214
    %s216 = ssub.s32 %s21, %s33
    %s217 = ssub.s32 %s22, %s29
    %s218 = sor.u32 %s216, %s217
    %p219 = scmp.eq.s32.totalorder %s218, 0
    %s221 = sadd.s32 %s220, 1
    %s222 = scalar_select %p219, %s220, %s221
    %p225 = pneg %p219
    %p226 = scmp.eq.s32.totalorder %s14, 1
    %p227 = por %p225, %p226
    %p228 = scmp.ne.s32.totalorder %s220, %s223
    %p229 = scmp.eq.s32.totalorder %s14, 0
    %p230 = por %p228, %p229
    %p231 = scmp.ne.s32.totalorder %s220, %s223
    %p232 = scmp.eq.s32.totalorder %s19, 1
    %p233 = por %p231, %p232
    %p234 = scmp.ne.s32.totalorder %s223, %s224
    %p235 = scmp.eq.s32.totalorder %s19, 0
    %p236 = por %p234, %p235
    %p237 = scmp.ne.s32.totalorder %s223, %s224
    %p238 = scmp.eq.s32.totalorder %s20, 1
    %p239 = por %p237, %p238
    %p241 = scmp.ne.s32.totalorder %s224, %s240
    %p242 = scmp.eq.s32.totalorder %s20, 0
    %p243 = por %p241, %p242
    %p244 = scmp.le.s32.totalorder 1, %s14
    %p245 = scmp.lt.s32.totalorder %s14, 3
    %p246 = pnand %p244, %p245
    %p247 = pneg %p246
    // Predicated region
    $region9: #{bottleneck_csp_forward.3} parent=5 // pred_check
      _
    $region10: #{bottleneck_csp_forward.3} parent=5 // pred_check_branch
      %249 = sbr.rel (%p246) target = $region12
    $region11: #{bottleneck_csp_forward.3} parent=5 // pred_region
      %s250 = ssub.s32 %s14, 1
      // Predicated region
      $region13: #{bottleneck_csp_forward.3} parent=11 // pred_check
        %p251 = pneg %p103
      $region14: #{bottleneck_csp_forward.3} parent=11 // pred_check_branch
        %253 = sbr.rel (%p251) target = $region16
      $region15: #{bottleneck_csp_forward.3} parent=11 // pred_region
        _
      $region16: #{bottleneck_csp_forward.3} parent=11 // pred_fallthru
        _
      // Predicated region
      $region17: #{bottleneck_csp_forward.3} parent=11 // pred_check
        %p254 = pneg %p124
      $region18: #{bottleneck_csp_forward.3} parent=11 // pred_check_branch
        %256 = sbr.rel (%p254) target = $region20
      $region19: #{bottleneck_csp_forward.3} parent=11 // pred_region
        _
      $region20: #{bottleneck_csp_forward.3} parent=11 // pred_fallthru
        _
      // Predicated region
      $region21: #{bottleneck_csp_forward.3} parent=11 // pred_check
        %p257 = pneg %p145
      $region22: #{bottleneck_csp_forward.3} parent=11 // pred_check_branch
        %259 = sbr.rel (%p257) target = $region24
      $region23: #{bottleneck_csp_forward.3} parent=11 // pred_region
        _
      $region24: #{bottleneck_csp_forward.3} parent=11 // pred_fallthru
        _
      // Predicated region
      $region25: #{bottleneck_csp_forward.3} parent=11 // pred_check
        %p260 = pneg %p166
      $region26: #{bottleneck_csp_forward.3} parent=11 // pred_check_branch
        %262 = sbr.rel (%p260) target = $region28
      $region27: #{bottleneck_csp_forward.3} parent=11 // pred_region
        _
      $region28: #{bottleneck_csp_forward.3} parent=11 // pred_fallthru
        _
      // Predicated region
      $region29: #{bottleneck_csp_forward.3} parent=11 // pred_check
        %p263 = pneg %p187
      $region30: #{bottleneck_csp_forward.3} parent=11 // pred_check_branch
        %265 = sbr.rel (%p263) target = $region32
      $region31: #{bottleneck_csp_forward.3} parent=11 // pred_region
        _
      $region32: #{bottleneck_csp_forward.3} parent=11 // pred_fallthru
        _
      // Predicated region
      $region33: #{bottleneck_csp_forward.3} parent=11 // pred_check
        %p266 = pneg %p208
      $region34: #{bottleneck_csp_forward.3} parent=11 // pred_check_branch
        %268 = sbr.rel (%p266) target = $region36
      $region35: #{bottleneck_csp_forward.3} parent=11 // pred_region
        _
      $region36: #{bottleneck_csp_forward.3} parent=11 // pred_fallthru
        _
    $region12: #{bottleneck_csp_forward.3} parent=5 // pred_fallthru
      _
    %p269 = scmp.lt.s32.totalorder %s14, 2
    // Predicated region
    $region37: #{bottleneck_csp_forward.3} parent=5 // pred_check
      %p270 = pneg %p269
    $region38: #{bottleneck_csp_forward.3} parent=5 // pred_check_branch
      %272 = sbr.rel (%p270) target = $region40
    $region39: #{bottleneck_csp_forward.3} parent=5 // pred_region
      // Predicated region
      $region41: #{bottleneck_csp_forward.3} parent=39 // pred_check
        %p273 = pneg %p48
      $region42: #{bottleneck_csp_forward.3} parent=39 // pred_check_branch
        %275 = sbr.rel (%p273) target = $region44
      $region43: #{bottleneck_csp_forward.3} parent=39 // pred_region
        %s276 = smul.u32 4, %s22
        %p277 = scmp.lt.s32.totalorder %s21, 1
        %s278 = scalar_select %p277, %s21, 1
        %p279 = scmp.lt.s32.totalorder %s276, 3
        %s280 = scalar_select %p279, %s276, 3
        %s281 = smul.addr %s278, 4
        %s282 = sadd.s32 %s280, %s281
        %s283 = smul.addr %s282, 2
        %s284 = scalar_lea.vmem %s0, %s283
        %s285 = smul.u32 4, %s22
      $region44: #{bottleneck_csp_forward.3} parent=39 // pred_fallthru
        _
      // Predicated region
      $region45: #{bottleneck_csp_forward.3} parent=39 // pred_check
        %p286 = pneg %p76
      $region46: #{bottleneck_csp_forward.3} parent=39 // pred_check_branch
        %288 = sbr.rel (%p286) target = $region48
      $region47: #{bottleneck_csp_forward.3} parent=39 // pred_region
        %s289 = smul.u32 4, %s22
        %p290 = scmp.lt.s32.totalorder %s21, 1
        %s291 = scalar_select %p290, %s21, 1
        %p292 = scmp.lt.s32.totalorder %s289, 3
        %s293 = scalar_select %p292, %s289, 3
        %s294 = smul.addr %s291, 4
        %s295 = sadd.s32 %s293, %s294
        %s296 = smul.addr %s295, 2
        %s297 = scalar_lea.vmem %s1, %s296
        %s298 = smul.u32 4, %s22
      $region48: #{bottleneck_csp_forward.3} parent=39 // pred_fallthru
        _
    $region40: #{bottleneck_csp_forward.3} parent=5 // pred_fallthru
      _
    %p299 = scmp.le.s32.totalorder 1, %s14
    %p300 = scmp.lt.s32.totalorder %s14, 3
    %p301 = pnand %p299, %p300
    %p302 = pneg %p301
    // Predicated region
    $region49: #{bottleneck_csp_forward.3} parent=5 // pred_check
      _
    $region50: #{bottleneck_csp_forward.3} parent=5 // pred_check_branch
      %304 = sbr.rel (%p301) target = $region52
    $region51: #{bottleneck_csp_forward.3} parent=5 // pred_region
      %s305 = ssub.s32 %s14, 1
      %s306 = smul.u32 4, %s24
      %p307 = scmp.lt.s32.totalorder %s23, 1
      %s308 = scalar_select %p307, %s23, 1
      %p309 = scmp.lt.s32.totalorder %s306, 3
      %s310 = scalar_select %p309, %s306, 3
      %s311 = smul.addr %s308, 4
      %s312 = sadd.s32 %s310, %s311
      %s313 = smul.addr %s312, 2
      %s314 = scalar_lea.vmem %s0, %s313
      %p315 = pneg %p54
      %p316 = pneg %p51
      %s317 = smul.u32 4, %s24
      %p318 = scmp.lt.s32.totalorder %s23, 1
      %s319 = scalar_select %p318, %s23, 1
      %p320 = scmp.lt.s32.totalorder %s317, 3
      %s321 = scalar_select %p320, %s317, 3
      %s322 = smul.addr %s319, 4
      %s323 = sadd.s32 %s321, %s322
      %s324 = smul.addr %s323, 2
      %s325 = scalar_lea.vmem %s1, %s324
      %p326 = pneg %p82
      %p327 = pneg %p79
      %p328 = pneg %p103
      %p329 = pneg %p100
      %p330 = pneg %p124
      %p331 = pneg %p121
      %p332 = pneg %p145
      %p333 = pneg %p142
      %p334 = pneg %p166
      %p335 = pneg %p163
      %p336 = pneg %p187
      %p337 = pneg %p184
      %p338 = pneg %p208
      %p339 = pneg %p205
      %p340 = pneg %p236
      %p341 = pneg %p233
      %s342 = smul.u32 4, %s24
      %p343 = scmp.lt.s32.totalorder %s23, 1
      %s344 = scalar_select %p343, %s23, 1
      %p345 = scmp.lt.s32.totalorder %s342, 3
      %s346 = scalar_select %p345, %s342, 3
      %s347 = smul.addr %s344, 4
      %s348 = sadd.s32 %s346, %s347
      %s349 = smul.addr %s348, 4
      %s350 = scalar_lea.vmem %s8, %s349
      %s351 = smul.u32 4, %s24
      %p352 = scmp.lt.s32.totalorder %s23, 1
      %s353 = scalar_select %p352, %s23, 1
      %p354 = scmp.lt.s32.totalorder %s351, 3
      %s355 = scalar_select %p354, %s351, 3
      %s356 = smul.addr %s353, 4
      %s357 = sadd.s32 %s355, %s356
      %s358 = smul.addr %s357, 2
      %s359 = scalar_lea.vmem %s0, %s358
      %s360 = smul.u32 4, %s24
      %s361 = smul.u32 4, %s24
      %p362 = scmp.lt.s32.totalorder %s23, 1
      %s363 = scalar_select %p362, %s23, 1
      %p364 = scmp.lt.s32.totalorder %s361, 3
      %s365 = scalar_select %p364, %s361, 3
      %s366 = smul.addr %s363, 4
      %s367 = sadd.s32 %s365, %s366
      %s368 = smul.addr %s367, 2
      %s369 = scalar_lea.vmem %s1, %s368
      %s370 = smul.u32 4, %s24
      %s371 = smul.u32 4, %s24
      %p372 = scmp.lt.s32.totalorder %s23, 1
      %s373 = scalar_select %p372, %s23, 1
      %p374 = scmp.lt.s32.totalorder %s371, 3
      %s375 = scalar_select %p374, %s371, 3
      %s376 = smul.addr %s373, 4
      %s377 = sadd.s32 %s375, %s376
      %s378 = smul.addr %s377, 4
      %s379 = scalar_lea.vmem %s8, %s378
      %s380 = smul.u32 4, %s24
      %v382 = vld [vmem:[%s2] sm:$0xf]
      %v383 = vld [vmem:[%s359] sm:$0xff]
      %v384 = vld [vmem:[%s3] sm:$0xff]
      %386 = vset.pattern.permute.xlu0 0
      %387 = vperm.xlu0 %386, %v384
      %v388 = vpop.permute.xlu0 %387
      %v391 = vcombine.high %v383, %v383
      %v393 = vunpack.c.l.s4 1983009808
      %v394 = vunpack.c.0.s8 %v393
      %v395 = vlaneseq
      %v396 = vshrl.u32 %v395, 7
      %v397 = vsub.s32 %v394, %v396
      %v398 = vrot.slane %v383, %v397
      %v400 = vunpack.c.l.s4 1983009808
      %v401 = vunpack.c.0.s8 %v400
      %v402 = vlaneseq
      %v403 = vshrl.u32 %v402, 7
      %v404 = vsub.s32 %v401, %v403
      %v405 = vrot.slane %v391, %v404
      %v406 = vcombine.high %v398, %v398
      %v407 = vcombine.high %v405, %v405
      %vm408 = vcmask 31744
      %v410 = vsel %vm408, %v382, 0
      %vm412 = vcmask 1041408
      %v414 = vsel %vm412, %v398, 0
      %v417 = vsel %vm412, %v406, 0
      %v420 = vsel %vm412, %v405, 0
      %v423 = vsel %vm412, %v407, 0
      %425 = vmatprep.subr.bf16.mxu0 0
      %426 = vmatpush1.bf16.msra.mxu0 0
      %427 = vmatprep.subr.bf16.mxu0 0
      %428 = vmatpush1.bf16.msra.mxu0 0
      %429 = vmatprep.subr.bf16.mxu0 0
      %430 = vmatpush1.bf16.msra.mxu0 0
      %431 = vmatprep.subr.bf16.mxu0 0
      %432 = vmatpush1.bf16.msra.mxu0 0
      %433 = vmatprep.subr.bf16.mxu0 0
      %434 = vmatpush1.bf16.msra.mxu0 0
      %435 = vmatprep.subr.bf16.mxu0 0
      %436 = vmatpush1.bf16.msra.mxu0 0
      %437 = vmatprep.subr.bf16.mxu0 0
      %438 = vmatpush1.bf16.msra.mxu0 0
      %439 = vmatprep.subr.bf16.mxu0 %v417
      %440 = vmatpush1.bf16.msra.mxu0 %v414
      %441 = vmatprep.subr.bf16.mxu0 0
      %442 = vmatpush2.bf16.msra.mxu0 0
      %443 = vmatprep.subr.bf16.mxu0 0
      %444 = vmatpush2.bf16.msra.mxu0 0
      %445 = vmatprep.subr.bf16.mxu0 0
      %446 = vmatpush2.bf16.msra.mxu0 0
      %447 = vmatprep.subr.bf16.mxu0 0
      %448 = vmatpush2.bf16.msra.mxu0 0
      %449 = vmatprep.subr.bf16.mxu0 0
      %450 = vmatpush2.bf16.msra.mxu0 0
      %451 = vmatprep.subr.bf16.mxu0 0
      %452 = vmatpush2.bf16.msra.mxu0 0
      %453 = vmatprep.subr.bf16.mxu0 0
      %454 = vmatpush2.bf16.msra.mxu0 0
      %455 = vmatprep.subr.bf16.mxu0 0
      %456 = vmatpush2.bf16.msra.mxu0 0
      %457 = vmatprep.mubr.bf16.mxu0 0
      %458 = vmatmul.mubr.bf16.gmra.mxu0 %v410
      %v459 = vpop.f32.mrf.mxu0
      %v460 = vadd.f32 %v388, %v459
      %v461 = vpop.f32.mrf.mxu0
      %v462 = vadd.f32 %v388, %v461
      %v463 = vpop.f32.mrf.mxu0
      %v464 = vpop.f32.mrf.mxu0
      %465 = vdwg.mxu0
      %466 = vmatprep.subr.bf16.mxu0 0
      %467 = vmatpush1.bf16.msra.mxu0 0
      %468 = vmatprep.subr.bf16.mxu0 0
      %469 = vmatpush1.bf16.msra.mxu0 0
      %470 = vmatprep.subr.bf16.mxu0 0
      %471 = vmatpush1.bf16.msra.mxu0 0
      %472 = vmatprep.subr.bf16.mxu0 0
      %473 = vmatpush1.bf16.msra.mxu0 0
      %474 = vmatprep.subr.bf16.mxu0 0
      %475 = vmatpush1.bf16.msra.mxu0 0
      %476 = vmatprep.subr.bf16.mxu0 0
      %477 = vmatpush1.bf16.msra.mxu0 0
      %478 = vmatprep.subr.bf16.mxu0 0
      %479 = vmatpush1.bf16.msra.mxu0 0
      %480 = vmatprep.subr.bf16.mxu0 %v423
      %481 = vmatpush1.bf16.msra.mxu0 %v420
      %482 = vmatprep.subr.bf16.mxu0 0
      %483 = vmatpush2.bf16.msra.mxu0 0
      %484 = vmatprep.subr.bf16.mxu0 0
      %485 = vmatpush2.bf16.msra.mxu0 0
      %486 = vmatprep.subr.bf16.mxu0 0
      %487 = vmatpush2.bf16.msra.mxu0 0
      %488 = vmatprep.subr.bf16.mxu0 0
      %489 = vmatpush2.bf16.msra.mxu0 0
      %490 = vmatprep.subr.bf16.mxu0 0
      %491 = vmatpush2.bf16.msra.mxu0 0
      %492 = vmatprep.subr.bf16.mxu0 0
      %493 = vmatpush2.bf16.msra.mxu0 0
      %494 = vmatprep.subr.bf16.mxu0 0
      %495 = vmatpush2.bf16.msra.mxu0 0
      %496 = vmatprep.subr.bf16.mxu0 0
      %497 = vmatpush2.bf16.msra.mxu0 0
      %498 = vmatprep.mubr.bf16.mxu0 0
      %499 = vmatmul.mubr.bf16.gmra.mxu0 %v410
      %v500 = vpop.f32.mrf.mxu0
      %v501 = vadd.f32 %v388, %v500
      %v502 = vpop.f32.mrf.mxu0
      %v503 = vadd.f32 %v388, %v502
      %v504 = vpop.f32.mrf.mxu0
      %v505 = vpop.f32.mrf.mxu0
      %506 = vdwg.mxu0
      %v507 = vld [vmem:[%s4] sm:$0xf]
      %v508 = vld [vmem:[%s369] sm:$0xff]
      %v509 = vld [vmem:[%s5] sm:$0xff]
      %511 = vset.pattern.permute.xlu0 0
      %512 = vperm.xlu0 %511, %v509
      %v513 = vpop.permute.xlu0 %512
      %v516 = vcombine.high %v508, %v508
      %v518 = vunpack.c.l.s4 1983009808
      %v519 = vunpack.c.0.s8 %v518
      %v520 = vlaneseq
      %v521 = vshrl.u32 %v520, 7
      %v522 = vsub.s32 %v519, %v521
      %v523 = vrot.slane %v508, %v522
      %v525 = vunpack.c.l.s4 1983009808
      %v526 = vunpack.c.0.s8 %v525
      %v527 = vlaneseq
      %v528 = vshrl.u32 %v527, 7
      %v529 = vsub.s32 %v526, %v528
      %v530 = vrot.slane %v516, %v529
      %v531 = vcombine.high %v523, %v523
      %v532 = vcombine.high %v530, %v530
      %v534 = vsel %vm408, %v507, 0
      %v537 = vsel %vm412, %v523, 0
      %v540 = vsel %vm412, %v531, 0
      %v543 = vsel %vm412, %v530, 0
      %v546 = vsel %vm412, %v532, 0
      %548 = vmatprep.subr.bf16.mxu0 0
      %549 = vmatpush1.bf16.msra.mxu0 0
      %550 = vmatprep.subr.bf16.mxu0 0
      %551 = vmatpush1.bf16.msra.mxu0 0
      %552 = vmatprep.subr.bf16.mxu0 0
      %553 = vmatpush1.bf16.msra.mxu0 0
      %554 = vmatprep.subr.bf16.mxu0 0
      %555 = vmatpush1.bf16.msra.mxu0 0
      %556 = vmatprep.subr.bf16.mxu0 0
      %557 = vmatpush1.bf16.msra.mxu0 0
      %558 = vmatprep.subr.bf16.mxu0 0
      %559 = vmatpush1.bf16.msra.mxu0 0
      %560 = vmatprep.subr.bf16.mxu0 0
      %561 = vmatpush1.bf16.msra.mxu0 0
      %562 = vmatprep.subr.bf16.mxu0 %v540
      %563 = vmatpush1.bf16.msra.mxu0 %v537
      %564 = vmatprep.subr.bf16.mxu0 0
      %565 = vmatpush2.bf16.msra.mxu0 0
      %566 = vmatprep.subr.bf16.mxu0 0
      %567 = vmatpush2.bf16.msra.mxu0 0
      %568 = vmatprep.subr.bf16.mxu0 0
      %569 = vmatpush2.bf16.msra.mxu0 0
      %570 = vmatprep.subr.bf16.mxu0 0
      %571 = vmatpush2.bf16.msra.mxu0 0
      %572 = vmatprep.subr.bf16.mxu0 0
      %573 = vmatpush2.bf16.msra.mxu0 0
      %574 = vmatprep.subr.bf16.mxu0 0
      %575 = vmatpush2.bf16.msra.mxu0 0
      %576 = vmatprep.subr.bf16.mxu0 0
      %577 = vmatpush2.bf16.msra.mxu0 0
      %578 = vmatprep.subr.bf16.mxu0 0
      %579 = vmatpush2.bf16.msra.mxu0 0
      %580 = vmatprep.mubr.bf16.mxu0 0
      %581 = vmatmul.mubr.bf16.gmra.mxu0 %v534
      %v582 = vpop.f32.mrf.mxu0
      %v583 = vadd.f32 %v513, %v582
      %v584 = vpop.f32.mrf.mxu0
      %v585 = vadd.f32 %v513, %v584
      %v586 = vpop.f32.mrf.mxu0
      %v587 = vpop.f32.mrf.mxu0
      %588 = vdwg.mxu0
      %589 = vmatprep.subr.bf16.mxu0 0
      %590 = vmatpush1.bf16.msra.mxu0 0
      %591 = vmatprep.subr.bf16.mxu0 0
      %592 = vmatpush1.bf16.msra.mxu0 0
      %593 = vmatprep.subr.bf16.mxu0 0
      %594 = vmatpush1.bf16.msra.mxu0 0
      %595 = vmatprep.subr.bf16.mxu0 0
      %596 = vmatpush1.bf16.msra.mxu0 0
      %597 = vmatprep.subr.bf16.mxu0 0
      %598 = vmatpush1.bf16.msra.mxu0 0
      %599 = vmatprep.subr.bf16.mxu0 0
      %600 = vmatpush1.bf16.msra.mxu0 0
      %601 = vmatprep.subr.bf16.mxu0 0
      %602 = vmatpush1.bf16.msra.mxu0 0
      %603 = vmatprep.subr.bf16.mxu0 %v546
      %604 = vmatpush1.bf16.msra.mxu0 %v543
      %605 = vmatprep.subr.bf16.mxu0 0
      %606 = vmatpush2.bf16.msra.mxu0 0
      %607 = vmatprep.subr.bf16.mxu0 0
      %608 = vmatpush2.bf16.msra.mxu0 0
      %609 = vmatprep.subr.bf16.mxu0 0
      %610 = vmatpush2.bf16.msra.mxu0 0
      %611 = vmatprep.subr.bf16.mxu0 0
      %612 = vmatpush2.bf16.msra.mxu0 0
      %613 = vmatprep.subr.bf16.mxu0 0
      %614 = vmatpush2.bf16.msra.mxu0 0
      %615 = vmatprep.subr.bf16.mxu0 0
      %616 = vmatpush2.bf16.msra.mxu0 0
      %617 = vmatprep.subr.bf16.mxu0 0
      %618 = vmatpush2.bf16.msra.mxu0 0
      %619 = vmatprep.subr.bf16.mxu0 0
      %620 = vmatpush2.bf16.msra.mxu0 0
      %621 = vmatprep.mubr.bf16.mxu0 0
      %622 = vmatmul.mubr.bf16.gmra.mxu0 %v534
      %v623 = vpop.f32.mrf.mxu0
      %v624 = vadd.f32 %v513, %v623
      %v625 = vpop.f32.mrf.mxu0
      %v626 = vadd.f32 %v513, %v625
      %v627 = vpop.f32.mrf.mxu0
      %v628 = vpop.f32.mrf.mxu0
      %629 = vdwg.mxu0
      %v630 = vmul.f32 %v460, 0.1
      %v631 = vmul.f32 %v462, 0.1
      %v632 = vmul.f32 %v501, 0.1
      %v633 = vmul.f32 %v503, 0.1
      %v634 = vmax.f32 %v460, %v630
      %v635 = vmax.f32 %v462, %v631
      %v636 = vmax.f32 %v501, %v632
      %v637 = vmax.f32 %v503, %v633
      %v638 = vpack.c.bf16 %v634, %v634
      %v639 = vpack.c.bf16 %v635, %v635
      %v640 = vpack.c.bf16 %v636, %v636
      %v641 = vpack.c.bf16 %v637, %v637
      %v646 = vunpack.c.l.b16 %v638
      %v647 = vunpack.c.l.b16 %v639
      %v648 = vunpack.c.l.b16 %v640
      %v649 = vunpack.c.l.b16 %v641
      %v650 = vpack.c.b16 %v647, %v646
      %v651 = vpack.c.b16 %v649, %v648
      %654 = vst [vmem:[#allocation2] sm:$0xff] %v650
      %655 = vst [vmem:[#allocation2 + $0x8] sm:$0xff] %v651
      %v656 = vmul.f32 %v583, 0.1
      %v657 = vmul.f32 %v585, 0.1
      %v658 = vmul.f32 %v624, 0.1
      %v659 = vmul.f32 %v626, 0.1
      %v660 = vmax.f32 %v583, %v656
      %v661 = vmax.f32 %v585, %v657
      %v662 = vmax.f32 %v624, %v658
      %v663 = vmax.f32 %v626, %v659
      %v664 = vpack.c.bf16 %v660, %v660
      %v665 = vpack.c.bf16 %v661, %v661
      %v666 = vpack.c.bf16 %v662, %v662
      %v667 = vpack.c.bf16 %v663, %v663
      %v672 = vunpack.c.l.b16 %v664
      %v673 = vunpack.c.l.b16 %v665
      %v674 = vunpack.c.l.b16 %v666
      %v675 = vunpack.c.l.b16 %v667
      %v676 = vpack.c.b16 %v673, %v672
      %v677 = vpack.c.b16 %v675, %v674
      %680 = vst [vmem:[#allocation2 + $0x10] sm:$0xff] %v676
      %681 = vst [vmem:[#allocation2 + $0x18] sm:$0xff] %v677
      %v682 = vld [vmem:[%s6] sm:$0xf]
      %v683 = vld [vmem:[#allocation2] sm:$0xff]
      %v684 = vld [vmem:[#allocation2 + $0x8] sm:$0xff]
      %v685 = vld [vmem:[#allocation2 + $0x10] sm:$0xff]
      %v686 = vld [vmem:[#allocation2 + $0x18] sm:$0xff]
      %v687 = vld [vmem:[%s7] sm:$0xff]
      %689 = vset.pattern.permute.xlu0 0
      %690 = vperm.xlu0 %689, %v687
      %v691 = vpop.permute.xlu0 %690
      %v697 = vunpack.c.l.b16 %v683
      %v698 = vunpack.c.h.b16 %v683
      %v699 = vunpack.c.l.b16 %v684
      %v700 = vunpack.c.h.b16 %v684
      %v701 = vunpack.c.l.b16 %v685
      %v702 = vunpack.c.h.b16 %v685
      %v703 = vunpack.c.l.b16 %v686
      %v704 = vunpack.c.h.b16 %v686
      %v705 = vpack.c.b16 %v701, %v697
      %v706 = vpack.c.b16 %v702, %v698
      %v707 = vpack.c.b16 %v703, %v699
      %v708 = vpack.c.b16 %v704, %v700
      %vm713 = vcmask 130048
      %v715 = vsel %vm713, %v682, 0
      %717 = vmatprep.subr.bf16.mxu0 0
      %718 = vmatpush1.bf16.msra.mxu0 0
      %719 = vmatprep.subr.bf16.mxu0 0
      %720 = vmatpush1.bf16.msra.mxu0 0
      %721 = vmatprep.subr.bf16.mxu0 0
      %722 = vmatpush1.bf16.msra.mxu0 0
      %723 = vmatprep.subr.bf16.mxu0 0
      %724 = vmatpush1.bf16.msra.mxu0 0
      %725 = vmatprep.subr.bf16.mxu0 0
      %726 = vmatpush1.bf16.msra.mxu0 0
      %727 = vmatprep.subr.bf16.mxu0 0
      %728 = vmatpush1.bf16.msra.mxu0 0
      %729 = vmatprep.subr.bf16.mxu0 0
      %730 = vmatpush1.bf16.msra.mxu0 0
      %731 = vmatprep.subr.bf16.mxu0 %v706
      %732 = vmatpush1.bf16.msra.mxu0 %v705
      %733 = vmatprep.subr.bf16.mxu0 0
      %734 = vmatpush2.bf16.msra.mxu0 0
      %735 = vmatprep.subr.bf16.mxu0 0
      %736 = vmatpush2.bf16.msra.mxu0 0
      %737 = vmatprep.subr.bf16.mxu0 0
      %738 = vmatpush2.bf16.msra.mxu0 0
      %739 = vmatprep.subr.bf16.mxu0 0
      %740 = vmatpush2.bf16.msra.mxu0 0
      %741 = vmatprep.subr.bf16.mxu0 0
      %742 = vmatpush2.bf16.msra.mxu0 0
      %743 = vmatprep.subr.bf16.mxu0 0
      %744 = vmatpush2.bf16.msra.mxu0 0
      %745 = vmatprep.subr.bf16.mxu0 0
      %746 = vmatpush2.bf16.msra.mxu0 0
      %747 = vmatprep.subr.bf16.mxu0 0
      %748 = vmatpush2.bf16.msra.mxu0 0
      %749 = vmatprep.mubr.bf16.mxu0 0
      %750 = vmatmul.mubr.bf16.gmra.mxu0 %v715
      %v751 = vpop.f32.mrf.mxu0
      %v752 = vadd.f32 %v691, %v751
      %v753 = vpop.f32.mrf.mxu0
      %v754 = vadd.f32 %v691, %v753
      %v755 = vpop.f32.mrf.mxu0
      %v756 = vpop.f32.mrf.mxu0
      %757 = vdwg.mxu0
      %758 = vmatprep.subr.bf16.mxu0 0
      %759 = vmatpush1.bf16.msra.mxu0 0
      %760 = vmatprep.subr.bf16.mxu0 0
      %761 = vmatpush1.bf16.msra.mxu0 0
      %762 = vmatprep.subr.bf16.mxu0 0
      %763 = vmatpush1.bf16.msra.mxu0 0
      %764 = vmatprep.subr.bf16.mxu0 0
      %765 = vmatpush1.bf16.msra.mxu0 0
      %766 = vmatprep.subr.bf16.mxu0 0
      %767 = vmatpush1.bf16.msra.mxu0 0
      %768 = vmatprep.subr.bf16.mxu0 0
      %769 = vmatpush1.bf16.msra.mxu0 0
      %770 = vmatprep.subr.bf16.mxu0 0
      %771 = vmatpush1.bf16.msra.mxu0 0
      %772 = vmatprep.subr.bf16.mxu0 %v708
      %773 = vmatpush1.bf16.msra.mxu0 %v707
      %774 = vmatprep.subr.bf16.mxu0 0
      %775 = vmatpush2.bf16.msra.mxu0 0
      %776 = vmatprep.subr.bf16.mxu0 0
      %777 = vmatpush2.bf16.msra.mxu0 0
      %778 = vmatprep.subr.bf16.mxu0 0
      %779 = vmatpush2.bf16.msra.mxu0 0
      %780 = vmatprep.subr.bf16.mxu0 0
      %781 = vmatpush2.bf16.msra.mxu0 0
      %782 = vmatprep.subr.bf16.mxu0 0
      %783 = vmatpush2.bf16.msra.mxu0 0
      %784 = vmatprep.subr.bf16.mxu0 0
      %785 = vmatpush2.bf16.msra.mxu0 0
      %786 = vmatprep.subr.bf16.mxu0 0
      %787 = vmatpush2.bf16.msra.mxu0 0
      %788 = vmatprep.subr.bf16.mxu0 0
      %789 = vmatpush2.bf16.msra.mxu0 0
      %790 = vmatprep.mubr.bf16.mxu0 0
      %791 = vmatmul.mubr.bf16.gmra.mxu0 %v715
      %v792 = vpop.f32.mrf.mxu0
      %v793 = vadd.f32 %v691, %v792
      %v794 = vpop.f32.mrf.mxu0
      %v795 = vadd.f32 %v691, %v794
      %v796 = vpop.f32.mrf.mxu0
      %v797 = vpop.f32.mrf.mxu0
      %798 = vdwg.mxu0
      %v799 = vmul.f32 %v752, 0.1
      %v800 = vmul.f32 %v754, 0.1
      %v801 = vmul.f32 %v793, 0.1
      %v802 = vmul.f32 %v795, 0.1
      %v803 = vmax.f32 %v752, %v799
      %v804 = vmax.f32 %v754, %v800
      %v805 = vmax.f32 %v793, %v801
      %v806 = vmax.f32 %v795, %v802
      %v807 = vpack.c.bf16 %v803, %v803
      %v808 = vpack.c.bf16 %v804, %v804
      %v809 = vpack.c.bf16 %v805, %v805
      %v810 = vpack.c.bf16 %v806, %v806
      %v815 = vunpack.c.l.b16 %v807
      %v816 = vunpack.c.l.b16 %v808
      %v817 = vunpack.c.l.b16 %v809
      %v818 = vunpack.c.l.b16 %v810
      %v819 = vpack.c.b16 %v816, %v815
      %v820 = vpack.c.b16 %v818, %v817
      %823 = vst [vmem:[%s379] sm:$0xff] %v819
      %824 = vst [vmem:[%s379 + $0x8] sm:$0xff] %v820
      %s825 = smul.u32 4, %s24
      %p826 = scmp.lt.s32.totalorder %s23, 1
      %s827 = scalar_select %p826, %s23, 1
      %p828 = scmp.lt.s32.totalorder %s825, 3
      %s829 = scalar_select %p828, %s825, 3
      %s830 = smul.addr %s827, 4
      %s831 = sadd.s32 %s829, %s830
      %s832 = smul.addr %s831, 4
      %s833 = scalar_lea.vmem %s8, %s832
      // Predicated region
      $region53: #{bottleneck_csp_forward.3} parent=51 // pred_check
        %p834 = pneg %p233
      $region54: #{bottleneck_csp_forward.3} parent=51 // pred_check_branch
        %836 = sbr.rel (%p834) target = $region56
      $region55: #{bottleneck_csp_forward.3} parent=51 // pred_region
        %s837 = smul.u32 4, %s24
      $region56: #{bottleneck_csp_forward.3} parent=51 // pred_fallthru
        _
    $region52: #{bottleneck_csp_forward.3} parent=5 // pred_fallthru
      _
    %p838 = scmp.le.s32.totalorder 2, %s14
    // Predicated region
    $region57: #{bottleneck_csp_forward.3} parent=5 // pred_check
      %p839 = pneg %p838
    $region58: #{bottleneck_csp_forward.3} parent=5 // pred_check_branch
      %841 = sbr.rel (%p839) target = $region60
    $region59: #{bottleneck_csp_forward.3} parent=5 // pred_region
      %s842 = ssub.s32 %s14, 2
      // Predicated region
      $region61: #{bottleneck_csp_forward.3} parent=59 // pred_check
        %p843 = pneg %p239
      $region62: #{bottleneck_csp_forward.3} parent=59 // pred_check_branch
        %845 = sbr.rel (%p843) target = $region64
      $region63: #{bottleneck_csp_forward.3} parent=59 // pred_region
        %s846 = smul.u32 4, %s26
        %p847 = scmp.lt.s32.totalorder %s25, 1
        %s848 = scalar_select %p847, %s25, 1
        %p849 = scmp.lt.s32.totalorder %s846, 3
        %s850 = scalar_select %p849, %s846, 3
        %s851 = smul.addr %s848, 4
        %s852 = sadd.s32 %s850, %s851
        %s853 = smul.addr %s852, 4
        %s854 = scalar_lea.vmem %s8, %s853
      $region64: #{bottleneck_csp_forward.3} parent=59 // pred_fallthru
        _
    $region60: #{bottleneck_csp_forward.3} parent=5 // pred_fallthru
      _
  $region6: #{bottleneck_csp_forward.3} parent=0 // loop_footer
    %s18 = sadd.s32 1, %s14
  $region7: #{bottleneck_csp_forward.3} parent=0 // loop_footer_branch
    %13 = sbr.rel target = $region3
  $region8: #{bottleneck_csp_forward.3} parent=0 // loop_exit
    _

// kernel: bottleneck_csp_forward.2
$region0: #{bottleneck_csp_forward.2}
  #allocation0 [shape = 'u32[]', space=smem, size = 0x4, offset = 0x4, fixed_abs, tag = 'smem constant byte address 0x4 - core index']
  #allocation1 [shape = 'u32[144,128]{1,0:T(1,128)}', space=vmem, size = 0x12000, scoped, tag = 'internal scratch']
  #allocation2 [shape = 'f32[4,512]{1,0:T(4,128)}', space=vmem, size = 0x2000, scoped, tag = 'scratch operand']
  #allocation3 [shape = 'bf16[72,512]{1,0:T(8,128)(2,1)}', space=vmem, size = 0x12000, scoped, tag = 'scratch operand']
  %s0 = inlined_call_operand.vmem [shape: bf16[2,4,512], index: 0, kind: input, shape index: {}]
  %s1 = inlined_call_operand.vmem [shape: bf16[4,4], index: 1, kind: input, shape index: {}]
  %s2 = inlined_call_operand.vmem [shape: f32[4,1], index: 2, kind: input, shape index: {}]
  %s3 = inlined_call_operand.vmem [shape: f32[1,512], index: 3, kind: input, shape index: {}]
  %s4 = inlined_call_operand.vmem [shape: bf16[2,8,4], index: 4, kind: input, shape index: {}]
  %s5 = inlined_call_operand.vmem [shape: f32[2,8,1], index: 5, kind: input, shape index: {}]
  %s6 = inlined_call_operand.vmem [shape: bf16[2,4,72], index: 6, kind: input, shape index: {}]
  %s7 = inlined_call_operand.vmem [shape: f32[2,4,1], index: 7, kind: input, shape index: {}]
  %s8 = inlined_call_operand.vmem [shape: bf16[2,4,512], index: 8, kind: output, shape index: {}]
  %s9 = sld [smem:[#allocation0]]
  $region65: #{bottleneck_csp_forward.2} parent=0
    _
  %s11 = ssub.s32 1, %s9
  %s12 = scalar_select 0, %s11, %s9
  loop: start=0, step=1, limit=4
  $region2: #{bottleneck_csp_forward.2} parent=0 // loop_pre_header
    _
  $region3: #{bottleneck_csp_forward.2} parent=0 // loop_header
    %s14 = sphi 0, %s18
    %p15 = scmp.ge.s32.totalorder %s14, 4
    %s24 = sphi 0, %s26
    %s27 = sphi 0, %s24
    %s28 = sphi 0, %s27
    %s44 = sphi 0, %s28
    %s48 = sphi 0, %s48
    %s50 = sphi 0, %s48
    %s51 = sphi 0, %s50
    %s65 = sphi 0, %s51
    %s69 = sphi 0, %s69
    %s71 = sphi 0, %s69
    %s72 = sphi 0, %s71
    %s86 = sphi 0, %s72
    %s90 = sphi 0, %s90
    %s92 = sphi 0, %s90
    %s93 = sphi 0, %s92
    %s107 = sphi 0, %s93
    %s111 = sphi 0, %s111
    %s113 = sphi 0, %s111
    %s114 = sphi 0, %s113
    %s128 = sphi 0, %s114
    %s132 = sphi 0, %s132
    %s134 = sphi 0, %s132
    %s135 = sphi 0, %s134
    %s149 = sphi 0, %s135
    %s153 = sphi 0, %s153
    %s155 = sphi 0, %s153
    %s156 = sphi 0, %s155
    %s170 = sphi 0, %s156
    %s174 = sphi 0, %s174
    %s176 = sphi 0, %s174
    %s177 = sphi 0, %s176
    %s191 = sphi 0, %s177
    %s197 = sphi 0, %s199
    %s200 = sphi 0, %s197
    %s201 = sphi 0, %s200
    %s217 = sphi 0, %s201
  $region4: #{bottleneck_csp_forward.2} parent=0 // loop_header_branch
    %17 = sbr.rel (%p15) target = $region8
  $region5: #{bottleneck_csp_forward.2} parent=0 // loop_body
    %s19 = ssub.s32 %s14, 1
    %s20 = ssub.s32 %s14, 2
    %s21 = sadd.s32 %s14, 1
    %s22 = ssub.s32 %s14, %s21
    %p23 = scmp.eq.s32.totalorder %s22, 0
    %s25 = sadd.s32 %s24, 1
    %s26 = scalar_select %p23, %s24, %s25
    %p29 = pneg %p23
    %p30 = scmp.eq.s32.totalorder %s14, 1
    %p31 = por %p29, %p30
    %p32 = scmp.ne.s32.totalorder %s24, %s27
    %p33 = scmp.eq.s32.totalorder %s14, 0
    %p34 = por %p32, %p33
    %p35 = scmp.ne.s32.totalorder %s24, %s27
    %p36 = scmp.eq.s32.totalorder %s19, 1
    %p37 = por %p35, %p36
    %p38 = scmp.ne.s32.totalorder %s27, %s28
    %p39 = scmp.eq.s32.totalorder %s19, 0
    %p40 = por %p38, %p39
    %p41 = scmp.ne.s32.totalorder %s27, %s28
    %p42 = scmp.eq.s32.totalorder %s20, 1
    %p43 = por %p41, %p42
    %p45 = scmp.ne.s32.totalorder %s28, %s44
    %p46 = scmp.eq.s32.totalorder %s20, 0
    %p47 = por %p45, %p46
    %s49 = sadd.s32 %s48, 1
    %p52 = scmp.eq.s32.totalorder %s14, 1
    %p53 = scmp.ne.s32.totalorder %s48, %s50
    %p54 = scmp.eq.s32.totalorder %s14, 0
    %p55 = por %p53, %p54
    %p56 = scmp.ne.s32.totalorder %s48, %s50
    %p57 = scmp.eq.s32.totalorder %s19, 1
    %p58 = por %p56, %p57
    %p59 = scmp.ne.s32.totalorder %s50, %s51
    %p60 = scmp.eq.s32.totalorder %s19, 0
    %p61 = por %p59, %p60
    %p62 = scmp.ne.s32.totalorder %s50, %s51
    %p63 = scmp.eq.s32.totalorder %s20, 1
    %p64 = por %p62, %p63
    %p66 = scmp.ne.s32.totalorder %s51, %s65
    %p67 = scmp.eq.s32.totalorder %s20, 0
    %p68 = por %p66, %p67
    %s70 = sadd.s32 %s69, 1
    %p73 = scmp.eq.s32.totalorder %s14, 1
    %p74 = scmp.ne.s32.totalorder %s69, %s71
    %p75 = scmp.eq.s32.totalorder %s14, 0
    %p76 = por %p74, %p75
    %p77 = scmp.ne.s32.totalorder %s69, %s71
    %p78 = scmp.eq.s32.totalorder %s19, 1
    %p79 = por %p77, %p78
    %p80 = scmp.ne.s32.totalorder %s71, %s72
    %p81 = scmp.eq.s32.totalorder %s19, 0
    %p82 = por %p80, %p81
    %p83 = scmp.ne.s32.totalorder %s71, %s72
    %p84 = scmp.eq.s32.totalorder %s20, 1
    %p85 = por %p83, %p84
    %p87 = scmp.ne.s32.totalorder %s72, %s86
    %p88 = scmp.eq.s32.totalorder %s20, 0
    %p89 = por %p87, %p88
    %s91 = sadd.s32 %s90, 1
    %p94 = scmp.eq.s32.totalorder %s14, 1
    %p95 = scmp.ne.s32.totalorder %s90, %s92
    %p96 = scmp.eq.s32.totalorder %s14, 0
    %p97 = por %p95, %p96
    %p98 = scmp.ne.s32.totalorder %s90, %s92
    %p99 = scmp.eq.s32.totalorder %s19, 1
    %p100 = por %p98, %p99
    %p101 = scmp.ne.s32.totalorder %s92, %s93
    %p102 = scmp.eq.s32.totalorder %s19, 0
    %p103 = por %p101, %p102
    %p104 = scmp.ne.s32.totalorder %s92, %s93
    %p105 = scmp.eq.s32.totalorder %s20, 1
    %p106 = por %p104, %p105
    %p108 = scmp.ne.s32.totalorder %s93, %s107
    %p109 = scmp.eq.s32.totalorder %s20, 0
    %p110 = por %p108, %p109
    %s112 = sadd.s32 %s111, 1
    %p115 = scmp.eq.s32.totalorder %s14, 1
    %p116 = scmp.ne.s32.totalorder %s111, %s113
    %p117 = scmp.eq.s32.totalorder %s14, 0
    %p118 = por %p116, %p117
    %p119 = scmp.ne.s32.totalorder %s111, %s113
    %p120 = scmp.eq.s32.totalorder %s19, 1
    %p121 = por %p119, %p120
    %p122 = scmp.ne.s32.totalorder %s113, %s114
    %p123 = scmp.eq.s32.totalorder %s19, 0
    %p124 = por %p122, %p123
    %p125 = scmp.ne.s32.totalorder %s113, %s114
    %p126 = scmp.eq.s32.totalorder %s20, 1
    %p127 = por %p125, %p126
    %p129 = scmp.ne.s32.totalorder %s114, %s128
    %p130 = scmp.eq.s32.totalorder %s20, 0
    %p131 = por %p129, %p130
    %s133 = sadd.s32 %s132, 1
    %p136 = scmp.eq.s32.totalorder %s14, 1
    %p137 = scmp.ne.s32.totalorder %s132, %s134
    %p138 = scmp.eq.s32.totalorder %s14, 0
    %p139 = por %p137, %p138
    %p140 = scmp.ne.s32.totalorder %s132, %s134
    %p141 = scmp.eq.s32.totalorder %s19, 1
    %p142 = por %p140, %p141
    %p143 = scmp.ne.s32.totalorder %s134, %s135
    %p144 = scmp.eq.s32.totalorder %s19, 0
    %p145 = por %p143, %p144
    %p146 = scmp.ne.s32.totalorder %s134, %s135
    %p147 = scmp.eq.s32.totalorder %s20, 1
    %p148 = por %p146, %p147
    %p150 = scmp.ne.s32.totalorder %s135, %s149
    %p151 = scmp.eq.s32.totalorder %s20, 0
    %p152 = por %p150, %p151
    %s154 = sadd.s32 %s153, 1
    %p157 = scmp.eq.s32.totalorder %s14, 1
    %p158 = scmp.ne.s32.totalorder %s153, %s155
    %p159 = scmp.eq.s32.totalorder %s14, 0
    %p160 = por %p158, %p159
    %p161 = scmp.ne.s32.totalorder %s153, %s155
    %p162 = scmp.eq.s32.totalorder %s19, 1
    %p163 = por %p161, %p162
    %p164 = scmp.ne.s32.totalorder %s155, %s156
    %p165 = scmp.eq.s32.totalorder %s19, 0
    %p166 = por %p164, %p165
    %p167 = scmp.ne.s32.totalorder %s155, %s156
    %p168 = scmp.eq.s32.totalorder %s20, 1
    %p169 = por %p167, %p168
    %p171 = scmp.ne.s32.totalorder %s156, %s170
    %p172 = scmp.eq.s32.totalorder %s20, 0
    %p173 = por %p171, %p172
    %s175 = sadd.s32 %s174, 1
    %p178 = scmp.eq.s32.totalorder %s14, 1
    %p179 = scmp.ne.s32.totalorder %s174, %s176
    %p180 = scmp.eq.s32.totalorder %s14, 0
    %p181 = por %p179, %p180
    %p182 = scmp.ne.s32.totalorder %s174, %s176
    %p183 = scmp.eq.s32.totalorder %s19, 1
    %p184 = por %p182, %p183
    %p185 = scmp.ne.s32.totalorder %s176, %s177
    %p186 = scmp.eq.s32.totalorder %s19, 0
    %p187 = por %p185, %p186
    %p188 = scmp.ne.s32.totalorder %s176, %s177
    %p189 = scmp.eq.s32.totalorder %s20, 1
    %p190 = por %p188, %p189
    %p192 = scmp.ne.s32.totalorder %s177, %s191
    %p193 = scmp.eq.s32.totalorder %s20, 0
    %p194 = por %p192, %p193
    %s195 = ssub.s32 %s14, %s21
    %p196 = scmp.eq.s32.totalorder %s195, 0
    %s198 = sadd.s32 %s197, 1
    %s199 = scalar_select %p196, %s197, %s198
    %p202 = pneg %p196
    %p203 = scmp.eq.s32.totalorder %s14, 1
    %p204 = por %p202, %p203
    %p205 = scmp.ne.s32.totalorder %s197, %s200
    %p206 = scmp.eq.s32.totalorder %s14, 0
    %p207 = por %p205, %p206
    %p208 = scmp.ne.s32.totalorder %s197, %s200
    %p209 = scmp.eq.s32.totalorder %s19, 1
    %p210 = por %p208, %p209
    %p211 = scmp.ne.s32.totalorder %s200, %s201
    %p212 = scmp.eq.s32.totalorder %s19, 0
    %p213 = por %p211, %p212
    %p214 = scmp.ne.s32.totalorder %s200, %s201
    %p215 = scmp.eq.s32.totalorder %s20, 1
    %p216 = por %p214, %p215
    %p218 = scmp.ne.s32.totalorder %s201, %s217
    %p219 = scmp.eq.s32.totalorder %s20, 0
    %p220 = por %p218, %p219
    %p221 = scmp.le.s32.totalorder 1, %s14
    %p222 = scmp.lt.s32.totalorder %s14, 3
    %p223 = pnand %p221, %p222
    %p224 = pneg %p223
    // Predicated region
    $region9: #{bottleneck_csp_forward.2} parent=5 // pred_check
      _
    $region10: #{bottleneck_csp_forward.2} parent=5 // pred_check_branch
      %226 = sbr.rel (%p223) target = $region12
    $region11: #{bottleneck_csp_forward.2} parent=5 // pred_region
      %s227 = ssub.s32 %s14, 1
      // Predicated region
      $region13: #{bottleneck_csp_forward.2} parent=11 // pred_check
        %p228 = pneg %p61
      $region14: #{bottleneck_csp_forward.2} parent=11 // pred_check_branch
        %230 = sbr.rel (%p228) target = $region16
      $region15: #{bottleneck_csp_forward.2} parent=11 // pred_region
        _
      $region16: #{bottleneck_csp_forward.2} parent=11 // pred_fallthru
        _
      // Predicated region
      $region17: #{bottleneck_csp_forward.2} parent=11 // pred_check
        %p231 = pneg %p82
      $region18: #{bottleneck_csp_forward.2} parent=11 // pred_check_branch
        %233 = sbr.rel (%p231) target = $region20
      $region19: #{bottleneck_csp_forward.2} parent=11 // pred_region
        _
      $region20: #{bottleneck_csp_forward.2} parent=11 // pred_fallthru
        _
      // Predicated region
      $region21: #{bottleneck_csp_forward.2} parent=11 // pred_check
        %p234 = pneg %p103
      $region22: #{bottleneck_csp_forward.2} parent=11 // pred_check_branch
        %236 = sbr.rel (%p234) target = $region24
      $region23: #{bottleneck_csp_forward.2} parent=11 // pred_region
        _
      $region24: #{bottleneck_csp_forward.2} parent=11 // pred_fallthru
        _
      // Predicated region
      $region25: #{bottleneck_csp_forward.2} parent=11 // pred_check
        %p237 = pneg %p124
      $region26: #{bottleneck_csp_forward.2} parent=11 // pred_check_branch
        %239 = sbr.rel (%p237) target = $region28
      $region27: #{bottleneck_csp_forward.2} parent=11 // pred_region
        _
      $region28: #{bottleneck_csp_forward.2} parent=11 // pred_fallthru
        _
      // Predicated region
      $region29: #{bottleneck_csp_forward.2} parent=11 // pred_check
        %p240 = pneg %p145
      $region30: #{bottleneck_csp_forward.2} parent=11 // pred_check_branch
        %242 = sbr.rel (%p240) target = $region32
      $region31: #{bottleneck_csp_forward.2} parent=11 // pred_region
        _
      $region32: #{bottleneck_csp_forward.2} parent=11 // pred_fallthru
        _
      // Predicated region
      $region33: #{bottleneck_csp_forward.2} parent=11 // pred_check
        %p243 = pneg %p166
      $region34: #{bottleneck_csp_forward.2} parent=11 // pred_check_branch
        %245 = sbr.rel (%p243) target = $region36
      $region35: #{bottleneck_csp_forward.2} parent=11 // pred_region
        _
      $region36: #{bottleneck_csp_forward.2} parent=11 // pred_fallthru
        _
      // Predicated region
      $region37: #{bottleneck_csp_forward.2} parent=11 // pred_check
        %p246 = pneg %p187
      $region38: #{bottleneck_csp_forward.2} parent=11 // pred_check_branch
        %248 = sbr.rel (%p246) target = $region40
      $region39: #{bottleneck_csp_forward.2} parent=11 // pred_region
        _
      $region40: #{bottleneck_csp_forward.2} parent=11 // pred_fallthru
        _
    $region12: #{bottleneck_csp_forward.2} parent=5 // pred_fallthru
      _
    %p249 = scmp.lt.s32.totalorder %s14, 2
    // Predicated region
    $region41: #{bottleneck_csp_forward.2} parent=5 // pred_check
      %p250 = pneg %p249
    $region42: #{bottleneck_csp_forward.2} parent=5 // pred_check_branch
      %252 = sbr.rel (%p250) target = $region44
    $region43: #{bottleneck_csp_forward.2} parent=5 // pred_region
      // Predicated region
      $region45: #{bottleneck_csp_forward.2} parent=43 // pred_check
        %p253 = pneg %p34
      $region46: #{bottleneck_csp_forward.2} parent=43 // pred_check_branch
        %255 = sbr.rel (%p253) target = $region48
      $region47: #{bottleneck_csp_forward.2} parent=43 // pred_region
        %p256 = scmp.lt.s32.totalorder %s14, 1
        %s257 = scalar_select %p256, %s14, 1
        %s258 = smul.addr %s257, 4
        %s259 = smul.addr %s258, 2
        %s260 = scalar_lea.vmem %s0, %s259
      $region48: #{bottleneck_csp_forward.2} parent=43 // pred_fallthru
        _
    $region44: #{bottleneck_csp_forward.2} parent=5 // pred_fallthru
      _
    %p261 = scmp.le.s32.totalorder 1, %s14
    %p262 = scmp.lt.s32.totalorder %s14, 3
    %p263 = pnand %p261, %p262
    %p264 = pneg %p263
    // Predicated region
    $region49: #{bottleneck_csp_forward.2} parent=5 // pred_check
      _
    $region50: #{bottleneck_csp_forward.2} parent=5 // pred_check_branch
      %266 = sbr.rel (%p263) target = $region52
    $region51: #{bottleneck_csp_forward.2} parent=5 // pred_region
      %s267 = ssub.s32 %s14, 1
      %p268 = scmp.lt.s32.totalorder %s19, 1
      %s269 = scalar_select %p268, %s19, 1
      %s270 = smul.addr %s269, 4
      %s271 = smul.addr %s270, 2
      %s272 = scalar_lea.vmem %s0, %s271
      %p273 = pneg %p40
      %p274 = pneg %p37
      %p275 = pneg %p61
      %p276 = pneg %p58
      %p277 = pneg %p82
      %p278 = pneg %p79
      %p279 = pneg %p103
      %p280 = pneg %p100
      %p281 = pneg %p124
      %p282 = pneg %p121
      %p283 = pneg %p145
      %p284 = pneg %p142
      %p285 = pneg %p166
      %p286 = pneg %p163
      %p287 = pneg %p187
      %p288 = pneg %p184
      %p289 = pneg %p213
      %p290 = pneg %p210
      %p291 = scmp.lt.s32.totalorder %s19, 1
      %s292 = scalar_select %p291, %s19, 1
      %s293 = smul.addr %s292, 4
      %s294 = smul.addr %s293, 2
      %s295 = scalar_lea.vmem %s8, %s294
      %p296 = scmp.lt.s32.totalorder %s19, 1
      %s297 = scalar_select %p296, %s19, 1
      %s298 = smul.addr %s297, 4
      %s299 = smul.addr %s298, 2
      %s300 = scalar_lea.vmem %s0, %s299
      %p301 = scmp.lt.s32.totalorder %s19, 1
      %s302 = scalar_select %p301, %s19, 1
      %s303 = smul.addr %s302, 4
      %s304 = smul.addr %s303, 2
      %s305 = scalar_lea.vmem %s8, %s304
      %v307 = vld [vmem:[%s3] sm:$0xf]
      %vm308 = vcmp.ne.f32.partialorder %v307, 0.0
      %v309 = vld [vmem:[%s1] sm:$0x3]
      %v310 = vld [vmem:[%s300] sm:$0xff]
      %v311 = vld [vmem:[%s2] sm:$0xf]
      %313 = vset.pattern.permute.xlu0 0
      %314 = vperm.xlu0 %313, %v311
      %v315 = vpop.permute.xlu0 %314
      %v318 = vcombine.high %v310, %v310
      %v320 = vunpack.c.l.s4 1983009808
      %v321 = vunpack.c.0.s8 %v320
      %v322 = vlaneseq
      %v323 = vshrl.u32 %v322, 7
      %v324 = vsub.s32 %v321, %v323
      %v325 = vrot.slane %v310, %v324
      %v327 = vunpack.c.l.s4 1983009808
      %v328 = vunpack.c.0.s8 %v327
      %v329 = vlaneseq
      %v330 = vshrl.u32 %v329, 7
      %v331 = vsub.s32 %v328, %v330
      %v332 = vrot.slane %v318, %v331
      %v333 = vcombine.high %v325, %v325
      %v334 = vcombine.high %v332, %v332
      %vm335 = vcmask 31744
      %v337 = vsel %vm335, %v309, 0
      %vm339 = vcmask 1041408
      %v341 = vsel %vm339, %v325, 0
      %v344 = vsel %vm339, %v333, 0
      %v347 = vsel %vm339, %v332, 0
      %v350 = vsel %vm339, %v334, 0
      %352 = vmatprep.subr.bf16.mxu0 0
      %353 = vmatpush1.bf16.msra.mxu0 0
      %354 = vmatprep.subr.bf16.mxu0 0
      %355 = vmatpush1.bf16.msra.mxu0 0
      %356 = vmatprep.subr.bf16.mxu0 0
      %357 = vmatpush1.bf16.msra.mxu0 0
      %358 = vmatprep.subr.bf16.mxu0 0
      %359 = vmatpush1.bf16.msra.mxu0 0
      %360 = vmatprep.subr.bf16.mxu0 0
      %361 = vmatpush1.bf16.msra.mxu0 0
      %362 = vmatprep.subr.bf16.mxu0 0
      %363 = vmatpush1.bf16.msra.mxu0 0
      %364 = vmatprep.subr.bf16.mxu0 0
      %365 = vmatpush1.bf16.msra.mxu0 0
      %366 = vmatprep.subr.bf16.mxu0 %v344
      %367 = vmatpush1.bf16.msra.mxu0 %v341
      %368 = vmatprep.subr.bf16.mxu0 0
      %369 = vmatpush2.bf16.msra.mxu0 0
      %370 = vmatprep.subr.bf16.mxu0 0
      %371 = vmatpush2.bf16.msra.mxu0 0
      %372 = vmatprep.subr.bf16.mxu0 0
      %373 = vmatpush2.bf16.msra.mxu0 0
      %374 = vmatprep.subr.bf16.mxu0 0
      %375 = vmatpush2.bf16.msra.mxu0 0
      %376 = vmatprep.subr.bf16.mxu0 0
      %377 = vmatpush2.bf16.msra.mxu0 0
      %378 = vmatprep.subr.bf16.mxu0 0
      %379 = vmatpush2.bf16.msra.mxu0 0
      %380 = vmatprep.subr.bf16.mxu0 0
      %381 = vmatpush2.bf16.msra.mxu0 0
      %382 = vmatprep.subr.bf16.mxu0 0
      %383 = vmatpush2.bf16.msra.mxu0 0
      %384 = vmatprep.mubr.bf16.mxu0 0
      %385 = vmatmul.mubr.bf16.gmra.mxu0 %v337
      %v386 = vpop.f32.mrf.mxu0
      %v387 = vadd.f32 %v315, %v386
      %v388 = vpop.f32.mrf.mxu0
      %v389 = vadd.f32 %v315, %v388
      %v390 = vpop.f32.mrf.mxu0
      %v391 = vpop.f32.mrf.mxu0
      %392 = vdwg.mxu0
      %393 = vmatprep.subr.bf16.mxu0 0
      %394 = vmatpush1.bf16.msra.mxu0 0
      %395 = vmatprep.subr.bf16.mxu0 0
      %396 = vmatpush1.bf16.msra.mxu0 0
      %397 = vmatprep.subr.bf16.mxu0 0
      %398 = vmatpush1.bf16.msra.mxu0 0
      %399 = vmatprep.subr.bf16.mxu0 0
      %400 = vmatpush1.bf16.msra.mxu0 0
      %401 = vmatprep.subr.bf16.mxu0 0
      %402 = vmatpush1.bf16.msra.mxu0 0
      %403 = vmatprep.subr.bf16.mxu0 0
      %404 = vmatpush1.bf16.msra.mxu0 0
      %405 = vmatprep.subr.bf16.mxu0 0
      %406 = vmatpush1.bf16.msra.mxu0 0
      %407 = vmatprep.subr.bf16.mxu0 %v350
      %408 = vmatpush1.bf16.msra.mxu0 %v347
      %409 = vmatprep.subr.bf16.mxu0 0
      %410 = vmatpush2.bf16.msra.mxu0 0
      %411 = vmatprep.subr.bf16.mxu0 0
      %412 = vmatpush2.bf16.msra.mxu0 0
      %413 = vmatprep.subr.bf16.mxu0 0
      %414 = vmatpush2.bf16.msra.mxu0 0
      %415 = vmatprep.subr.bf16.mxu0 0
      %416 = vmatpush2.bf16.msra.mxu0 0
      %417 = vmatprep.subr.bf16.mxu0 0
      %418 = vmatpush2.bf16.msra.mxu0 0
      %419 = vmatprep.subr.bf16.mxu0 0
      %420 = vmatpush2.bf16.msra.mxu0 0
      %421 = vmatprep.subr.bf16.mxu0 0
      %422 = vmatpush2.bf16.msra.mxu0 0
      %423 = vmatprep.subr.bf16.mxu0 0
      %424 = vmatpush2.bf16.msra.mxu0 0
      %425 = vmatprep.mubr.bf16.mxu0 0
      %426 = vmatmul.mubr.bf16.gmra.mxu0 %v337
      %v427 = vpop.f32.mrf.mxu0
      %v428 = vadd.f32 %v315, %v427
      %v429 = vpop.f32.mrf.mxu0
      %v430 = vadd.f32 %v315, %v429
      %v431 = vpop.f32.mrf.mxu0
      %v432 = vpop.f32.mrf.mxu0
      %433 = vdwg.mxu0
      %v434 = vmul.f32 %v387, 0.1
      %v435 = vmul.f32 %v389, 0.1
      %v436 = vmul.f32 %v428, 0.1
      %v437 = vmul.f32 %v430, 0.1
      %v438 = vmax.f32 %v387, %v434
      %v439 = vmax.f32 %v389, %v435
      %v440 = vmax.f32 %v428, %v436
      %v441 = vmax.f32 %v430, %v437
      %v442 = vsel %vm308, 1, 0
      %v443 = vlaneseq
      %v444 = vshrl.u32 %v443, 7
      %v445 = vsub.s32 0, %v444
      %v446 = vrot.slane %v442, %v445
      %v447 = vlaneseq
      %v448 = vshrl.u32 %v447, 7
      %v449 = vsub.s32 1, %v448
      %v450 = vrot.slane %v442, %v449
      %v451 = vlaneseq
      %v452 = vshrl.u32 %v451, 7
      %v453 = vsub.s32 2, %v452
      %v454 = vrot.slane %v442, %v453
      %v455 = vlaneseq
      %v456 = vshrl.u32 %v455, 7
      %v457 = vsub.s32 3, %v456
      %v458 = vrot.slane %v442, %v457
      %vm459 = vcmp.eq.s32.totalorder %v446, 1
      %vm460 = vcmp.eq.s32.totalorder %v450, 1
      %vm461 = vcmp.eq.s32.totalorder %v454, 1
      %vm462 = vcmp.eq.s32.totalorder %v458, 1
      %v463 = vsel %vm459, %v438, 0.0
      %v464 = vsel %vm460, %v439, 0.0
      %v465 = vsel %vm461, %v440, 0.0
      %v466 = vsel %vm462, %v441, 0.0
      %v471 = vcombine.low %v463, %v464
      %v472 = vcombine.low %v465, %v466
      %475 = vst [vmem:[#allocation2] sm:$0xff] %v471
      %476 = vst [vmem:[#allocation2 + $0x8] sm:$0xff] %v472
      %v477 = vld [vmem:[%s4] sm:$0xf]
      %v478 = vld [vmem:[#allocation2] sm:$0xff]
      %v479 = vld [vmem:[#allocation2 + $0x8] sm:$0xff]
      %v482 = vcombine.high %v478, %v478
      %v483 = vcombine.high %v479, %v479
      %v486 = vpack.c.bf16 %v478, %v478
      %v487 = vpack.c.bf16 %v482, %v482
      %v488 = vpack.c.bf16 %v479, %v479
      %v489 = vpack.c.bf16 %v483, %v483
      %v490 = vld [vmem:[%s5] sm:$0xff]
      %492 = vset.pattern.permute.xlu0 0
      %493 = vperm.xlu0 %492, %v490
      %v494 = vpop.permute.xlu0 %493
      %v497 = vsel %vm335, %v477, 0
      %v500 = vsel %vm339, %v486, 0
      %v503 = vsel %vm339, %v487, 0
      %v506 = vsel %vm339, %v488, 0
      %v509 = vsel %vm339, %v489, 0
      %511 = vmatprep.subr.bf16.mxu0 0
      %512 = vmatpush1.bf16.msra.mxu0 0
      %513 = vmatprep.subr.bf16.mxu0 0
      %514 = vmatpush1.bf16.msra.mxu0 0
      %515 = vmatprep.subr.bf16.mxu0 0
      %516 = vmatpush1.bf16.msra.mxu0 0
      %517 = vmatprep.subr.bf16.mxu0 0
      %518 = vmatpush1.bf16.msra.mxu0 0
      %519 = vmatprep.subr.bf16.mxu0 0
      %520 = vmatpush1.bf16.msra.mxu0 0
      %521 = vmatprep.subr.bf16.mxu0 0
      %522 = vmatpush1.bf16.msra.mxu0 0
      %523 = vmatprep.subr.bf16.mxu0 0
      %524 = vmatpush1.bf16.msra.mxu0 0
      %525 = vmatprep.subr.bf16.mxu0 %v503
      %526 = vmatpush1.bf16.msra.mxu0 %v500
      %527 = vmatprep.subr.bf16.mxu0 0
      %528 = vmatpush2.bf16.msra.mxu0 0
      %529 = vmatprep.subr.bf16.mxu0 0
      %530 = vmatpush2.bf16.msra.mxu0 0
      %531 = vmatprep.subr.bf16.mxu0 0
      %532 = vmatpush2.bf16.msra.mxu0 0
      %533 = vmatprep.subr.bf16.mxu0 0
      %534 = vmatpush2.bf16.msra.mxu0 0
      %535 = vmatprep.subr.bf16.mxu0 0
      %536 = vmatpush2.bf16.msra.mxu0 0
      %537 = vmatprep.subr.bf16.mxu0 0
      %538 = vmatpush2.bf16.msra.mxu0 0
      %539 = vmatprep.subr.bf16.mxu0 0
      %540 = vmatpush2.bf16.msra.mxu0 0
      %541 = vmatprep.subr.bf16.mxu0 0
      %542 = vmatpush2.bf16.msra.mxu0 0
      %543 = vmatprep.mubr.bf16.mxu0 0
      %544 = vmatmul.mubr.bf16.gmra.mxu0 %v497
      %v545 = vpop.f32.mrf.mxu0
      %v546 = vadd.f32 %v494, %v545
      %v547 = vpop.f32.mrf.mxu0
      %v548 = vadd.f32 %v494, %v547
      %v549 = vpop.f32.mrf.mxu0
      %v550 = vpop.f32.mrf.mxu0
      %551 = vdwg.mxu0
      %552 = vmatprep.subr.bf16.mxu0 0
      %553 = vmatpush1.bf16.msra.mxu0 0
      %554 = vmatprep.subr.bf16.mxu0 0
      %555 = vmatpush1.bf16.msra.mxu0 0
      %556 = vmatprep.subr.bf16.mxu0 0
      %557 = vmatpush1.bf16.msra.mxu0 0
      %558 = vmatprep.subr.bf16.mxu0 0
      %559 = vmatpush1.bf16.msra.mxu0 0
      %560 = vmatprep.subr.bf16.mxu0 0
      %561 = vmatpush1.bf16.msra.mxu0 0
      %562 = vmatprep.subr.bf16.mxu0 0
      %563 = vmatpush1.bf16.msra.mxu0 0
      %564 = vmatprep.subr.bf16.mxu0 0
      %565 = vmatpush1.bf16.msra.mxu0 0
      %566 = vmatprep.subr.bf16.mxu0 %v509
      %567 = vmatpush1.bf16.msra.mxu0 %v506
      %568 = vmatprep.subr.bf16.mxu0 0
      %569 = vmatpush2.bf16.msra.mxu0 0
      %570 = vmatprep.subr.bf16.mxu0 0
      %571 = vmatpush2.bf16.msra.mxu0 0
      %572 = vmatprep.subr.bf16.mxu0 0
      %573 = vmatpush2.bf16.msra.mxu0 0
      %574 = vmatprep.subr.bf16.mxu0 0
      %575 = vmatpush2.bf16.msra.mxu0 0
      %576 = vmatprep.subr.bf16.mxu0 0
      %577 = vmatpush2.bf16.msra.mxu0 0
      %578 = vmatprep.subr.bf16.mxu0 0
      %579 = vmatpush2.bf16.msra.mxu0 0
      %580 = vmatprep.subr.bf16.mxu0 0
      %581 = vmatpush2.bf16.msra.mxu0 0
      %582 = vmatprep.subr.bf16.mxu0 0
      %583 = vmatpush2.bf16.msra.mxu0 0
      %584 = vmatprep.mubr.bf16.mxu0 0
      %585 = vmatmul.mubr.bf16.gmra.mxu0 %v497
      %v586 = vpop.f32.mrf.mxu0
      %v587 = vadd.f32 %v494, %v586
      %v588 = vpop.f32.mrf.mxu0
      %v589 = vadd.f32 %v494, %v588
      %v590 = vpop.f32.mrf.mxu0
      %v591 = vpop.f32.mrf.mxu0
      %592 = vdwg.mxu0
      %v593 = vmul.f32 %v546, 0.1
      %v594 = vmul.f32 %v548, 0.1
      %v595 = vmul.f32 %v587, 0.1
      %v596 = vmul.f32 %v589, 0.1
      %v597 = vmax.f32 %v546, %v593
      %v598 = vmax.f32 %v548, %v594
      %v599 = vmax.f32 %v587, %v595
      %v600 = vmax.f32 %v589, %v596
      %v601 = vsel %vm459, %v597, 0.0
      %v602 = vsel %vm460, %v598, 0.0
      %v603 = vsel %vm461, %v599, 0.0
      %v604 = vsel %vm462, %v600, 0.0
      %v605 = vpack.c.bf16 %v601, %v601
      %v606 = vpack.c.bf16 %v602, %v602
      %v607 = vpack.c.bf16 %v603, %v603
      %v608 = vpack.c.bf16 %v604, %v604
      %v613 = vunpack.c.l.b16 %v605
      %v614 = vunpack.c.l.b16 %v606
      %v615 = vunpack.c.l.b16 %v607
      %v616 = vunpack.c.l.b16 %v608
      %v617 = vpack.c.b16 %v614, %v613
      %v618 = vpack.c.b16 %v616, %v615
      %621 = vst [vmem:[#allocation3 + $0x40] sm:$0xff] %v617
      %622 = vst [vmem:[#allocation3 + $0x48] sm:$0xff] %v618
      %v623 = vld [vmem:[#allocation3 + $0x40] sm:$0xff]
      %v624 = vld [vmem:[#allocation3 + $0x48] sm:$0xff]
      %627 = vrot.lane.b32.xlu0 %v623, 19
      %v628 = vpop.permute.xlu0 %627
      %629 = vrot.lane.b32.xlu0 %v624, 19
      %v630 = vpop.permute.xlu0 %629
      %v631 = vrot.slane %v628, 4
      %v632 = vrot.slane %v630, 4
      %vm633 = vcmask 1043456
      %v634 = vsel %vm633, %v631, %v632
      %vm635 = vcmask 154624
      %v636 = vsel %vm635, %v628, %v634
      %v637 = vsel %vm635, %v630, %v632
      %640 = vst [vmem:[#allocation3 + $0x4] sm:$0xff] %v636
      %vm641 = vcmask 257024
      %642 = vst.msk [vmem:[#allocation3 + $0xc] sm:$0xf] %vm641, %v637
      %v643 = vld [vmem:[#allocation3 + $0x40] sm:$0xff]
      %v644 = vld [vmem:[#allocation3 + $0x48] sm:$0xff]
      %647 = vrot.lane.b32.xlu0 %v643, 18
      %v648 = vpop.permute.xlu0 %647
      %649 = vrot.lane.b32.xlu0 %v644, 18
      %v650 = vpop.permute.xlu0 %649
      %v651 = vrot.slane %v648, 4
      %v652 = vrot.slane %v650, 4
      %v653 = vsel %vm633, %v651, %v652
      %vm654 = vcmask 146432
      %v655 = vsel %vm654, %v648, %v653
      %v656 = vsel %vm654, %v650, %v652
      %659 = vst [vmem:[#allocation3 + $0x14] sm:$0xff] %v655
      %660 = vst.msk [vmem:[#allocation3 + $0x1c] sm:$0xf] %vm641, %v656
      %v661 = vld [vmem:[#allocation3 + $0x40] sm:$0xff]
      %v662 = vld [vmem:[#allocation3 + $0x48] sm:$0xff]
      %665 = vrot.lane.b32.xlu0 %v661, 17
      %v666 = vpop.permute.xlu0 %665
      %667 = vrot.lane.b32.xlu0 %v662, 17
      %v668 = vpop.permute.xlu0 %667
      %v669 = vrot.slane %v666, 4
      %v670 = vrot.slane %v668, 4
      %v671 = vsel %vm633, %v669, %v670
      %vm672 = vcmask 138240
      %v673 = vsel %vm672, %v666, %v671
      %v674 = vsel %vm672, %v668, %v670
      %677 = vst [vmem:[#allocation3 + $0x24] sm:$0xff] %v673
      %678 = vst.msk [vmem:[#allocation3 + $0x2c] sm:$0xf] %vm641, %v674
      %v679 = vld [vmem:[#allocation3 + $0x40] sm:$0xff]
      %v680 = vld [vmem:[#allocation3 + $0x48] sm:$0xff]
      %683 = vrot.lane.b32.xlu0 %v679, 1
      %v684 = vpop.permute.xlu0 %683
      %685 = vrot.lane.b32.xlu0 %v680, 1
      %v686 = vpop.permute.xlu0 %685
      %v687 = vrot.slane %v684, 4
      %v688 = vrot.slane %v686, 4
      %v689 = vsel %vm633, %v687, %v688
      %vm690 = vcmask 7168
      %v691 = vsel %vm690, %v684, %v689
      %v692 = vsel %vm690, %v686, %v688
      %695 = vst [vmem:[#allocation3 + $0x34] sm:$0xff] %v691
      %696 = vst.msk [vmem:[#allocation3 + $0x3c] sm:$0xf] %vm641, %v692
      %v697 = vld [vmem:[#allocation3 + $0x44] sm:$0xff]
      %v698 = vld [vmem:[#allocation3 + $0x4c] sm:$0xf]
      %701 = vrot.lane.b32.xlu0 %v697, 127
      %v702 = vpop.permute.xlu0 %701
      %703 = vrot.lane.b32.xlu0 %v698, 127
      %v704 = vpop.permute.xlu0 %703
      %v705 = vrot.slane %v702, 4
      %v706 = vrot.slane %v704, 4
      %v707 = vsel %vm633, %v705, %v706
      %vm708 = vcmask 1039360
      %v709 = vsel %vm708, %v702, %v707
      %712 = vst [vmem:[#allocation3 + $0x54] sm:$0xff] %v709
      %713 = vst.msk [vmem:[#allocation3 + $0x5c] sm:$0xf] %vm641, %v704
      %v714 = vld [vmem:[#allocation3 + $0x44] sm:$0xff]
      %v715 = vld [vmem:[#allocation3 + $0x4c] sm:$0xf]
      %718 = vrot.lane.b32.xlu0 %v714, 111
      %v719 = vpop.permute.xlu0 %718
      %720 = vrot.lane.b32.xlu0 %v715, 111
      %v721 = vpop.permute.xlu0 %720
      %v722 = vrot.slane %v719, 4
      %v723 = vrot.slane %v721, 4
      %v724 = vsel %vm633, %v722, %v723
      %vm725 = vcmask 908288
      %v726 = vsel %vm725, %v719, %v724
      %729 = vst [vmem:[#allocation3 + $0x64] sm:$0xff] %v726
      %730 = vst.msk [vmem:[#allocation3 + $0x6c] sm:$0xf] %vm641, %v721
      %v731 = vld [vmem:[#allocation3 + $0x44] sm:$0xff]
      %v732 = vld [vmem:[#allocation3 + $0x4c] sm:$0xf]
      %735 = vrot.lane.b32.xlu0 %v731, 110
      %v736 = vpop.permute.xlu0 %735
      %737 = vrot.lane.b32.xlu0 %v732, 110
      %v738 = vpop.permute.xlu0 %737
      %v739 = vrot.slane %v736, 4
      %v740 = vrot.slane %v738, 4
      %v741 = vsel %vm633, %v739, %v740
      %vm742 = vcmask 900096
      %v743 = vsel %vm742, %v736, %v741
      %746 = vst [vmem:[#allocation3 + $0x74] sm:$0xff] %v743
      %747 = vst.msk [vmem:[#allocation3 + $0x7c] sm:$0xf] %vm641, %v738
      %v748 = vld [vmem:[#allocation3 + $0x44] sm:$0xff]
      %v749 = vld [vmem:[#allocation3 + $0x4c] sm:$0xf]
      %752 = vrot.lane.b32.xlu0 %v748, 109
      %v753 = vpop.permute.xlu0 %752
      %754 = vrot.lane.b32.xlu0 %v749, 109
      %v755 = vpop.permute.xlu0 %754
      %v756 = vrot.slane %v753, 4
      %v757 = vrot.slane %v755, 4
      %v758 = vsel %vm633, %v756, %v757
      %vm759 = vcmask 891904
      %v760 = vsel %vm759, %v753, %v758
      %763 = vst [vmem:[#allocation3 + $0x84] sm:$0xff] %v760
      %764 = vst.msk [vmem:[#allocation3 + $0x8c] sm:$0xf] %vm641, %v755
      %v765 = vld [vmem:[%s6] sm:$0x3]
      %v766 = vld [vmem:[#allocation3] sm:$0xff]
      %v767 = vld [vmem:[#allocation3 + $0x8] sm:$0xff]
      %v768 = vld [vmem:[#allocation3 + $0x10] sm:$0xff]
      %v769 = vld [vmem:[#allocation3 + $0x18] sm:$0xff]
      %v770 = vld [vmem:[#allocation3 + $0x20] sm:$0xff]
      %v771 = vld [vmem:[#allocation3 + $0x28] sm:$0xff]
      %v772 = vld [vmem:[#allocation3 + $0x30] sm:$0xff]
      %v773 = vld [vmem:[#allocation3 + $0x38] sm:$0xff]
      %v774 = vld [vmem:[#allocation3 + $0x40] sm:$0xff]
      %v775 = vld [vmem:[#allocation3 + $0x48] sm:$0xff]
      %v776 = vld [vmem:[#allocation3 + $0x50] sm:$0xff]
      %v777 = vld [vmem:[#allocation3 + $0x58] sm:$0xff]
      %v778 = vld [vmem:[#allocation3 + $0x60] sm:$0xff]
      %v779 = vld [vmem:[#allocation3 + $0x68] sm:$0xff]
      %v780 = vld [vmem:[#allocation3 + $0x70] sm:$0xff]
      %v781 = vld [vmem:[#allocation3 + $0x78] sm:$0xff]
      %v782 = vld [vmem:[#allocation3 + $0x80] sm:$0xff]
      %v783 = vld [vmem:[#allocation3 + $0x88] sm:$0xff]
      %v784 = vld [vmem:[%s7] sm:$0xf]
      %786 = vset.pattern.permute.xlu0 0
      %787 = vperm.xlu0 %786, %v784
      %v788 = vpop.permute.xlu0 %787
      %v808 = vunpack.c.l.b16 %v766
      %v809 = vunpack.c.h.b16 %v766
      %v810 = vunpack.c.l.b16 %v767
      %v811 = vunpack.c.h.b16 %v767
      %v812 = vunpack.c.l.b16 %v768
      %v813 = vunpack.c.h.b16 %v768
      %v814 = vunpack.c.l.b16 %v769
      %v815 = vunpack.c.h.b16 %v769
      %v816 = vunpack.c.l.b16 %v770
      %v817 = vunpack.c.h.b16 %v770
      %v818 = vunpack.c.l.b16 %v771
      %v819 = vunpack.c.h.b16 %v771
      %v820 = vunpack.c.l.b16 %v772
      %v821 = vunpack.c.h.b16 %v772
      %v822 = vunpack.c.l.b16 %v773
      %v823 = vunpack.c.h.b16 %v773
      %v824 = vunpack.c.l.b16 %v774
      %v825 = vunpack.c.h.b16 %v774
      %v826 = vunpack.c.l.b16 %v775
      %v827 = vunpack.c.h.b16 %v775
      %v828 = vunpack.c.l.b16 %v776
      %v829 = vunpack.c.h.b16 %v776
      %v830 = vunpack.c.l.b16 %v777
      %v831 = vunpack.c.h.b16 %v777
      %v832 = vunpack.c.l.b16 %v778
      %v833 = vunpack.c.h.b16 %v778
      %v834 = vunpack.c.l.b16 %v779
      %v835 = vunpack.c.h.b16 %v779
      %v836 = vunpack.c.l.b16 %v780
      %v837 = vunpack.c.h.b16 %v780
      %v838 = vunpack.c.l.b16 %v781
      %v839 = vunpack.c.h.b16 %v781
      %v840 = vunpack.c.l.b16 %v782
      %v841 = vunpack.c.h.b16 %v782
      %v842 = vunpack.c.l.b16 %v783
      %v843 = vunpack.c.h.b16 %v783
      %v844 = vpack.c.b16 %v812, %v808
      %v845 = vpack.c.b16 %v813, %v809
      %v846 = vpack.c.b16 %v814, %v810
      %v847 = vpack.c.b16 %v815, %v811
      %v848 = vpack.c.b16 %v820, %v816
      %v849 = vpack.c.b16 %v821, %v817
      %v850 = vpack.c.b16 %v822, %v818
      %v851 = vpack.c.b16 %v823, %v819
      %v852 = vpack.c.b16 %v828, %v824
      %v853 = vpack.c.b16 %v829, %v825
      %v854 = vpack.c.b16 %v830, %v826
      %v855 = vpack.c.b16 %v831, %v827
      %v856 = vpack.c.b16 %v836, %v832
      %v857 = vpack.c.b16 %v837, %v833
      %v858 = vpack.c.b16 %v838, %v834
      %v859 = vpack.c.b16 %v839, %v835
      %v860 = vpack.c.b16 %v840, %v840
      %v861 = vpack.c.b16 %v841, %v841
      %v862 = vpack.c.b16 %v842, %v842
      %v863 = vpack.c.b16 %v843, %v843
      %vm880 = vcmask 588800
      %v882 = vsel %vm880, %v765, 0
      %vm884 = vcmask 1043456
      %v886 = vsel %vm884, %v860, 0
      %v889 = vsel %vm884, %v861, 0
      %v892 = vsel %vm884, %v862, 0
      %v895 = vsel %vm884, %v863, 0
      %897 = vmatprep.subr.bf16.mxu0 0
      %898 = vmatpush1.bf16.msra.mxu0 0
      %899 = vmatprep.subr.bf16.mxu0 0
      %900 = vmatpush1.bf16.msra.mxu0 0
      %901 = vmatprep.subr.bf16.mxu0 0
      %902 = vmatpush1.bf16.msra.mxu0 0
      %903 = vmatprep.subr.bf16.mxu0 %v889
      %904 = vmatpush1.bf16.msra.mxu0 %v886
      %905 = vmatprep.subr.bf16.mxu0 %v857
      %906 = vmatpush1.bf16.msra.mxu0 %v856
      %907 = vmatprep.subr.bf16.mxu0 %v853
      %908 = vmatpush1.bf16.msra.mxu0 %v852
      %909 = vmatprep.subr.bf16.mxu0 %v849
      %910 = vmatpush1.bf16.msra.mxu0 %v848
      %911 = vmatprep.subr.bf16.mxu0 %v845
      %912 = vmatpush1.bf16.msra.mxu0 %v844
      %913 = vmatprep.subr.bf16.mxu0 0
      %914 = vmatpush2.bf16.msra.mxu0 0
      %915 = vmatprep.subr.bf16.mxu0 0
      %916 = vmatpush2.bf16.msra.mxu0 0
      %917 = vmatprep.subr.bf16.mxu0 0
      %918 = vmatpush2.bf16.msra.mxu0 0
      %919 = vmatprep.subr.bf16.mxu0 0
      %920 = vmatpush2.bf16.msra.mxu0 0
      %921 = vmatprep.subr.bf16.mxu0 0
      %922 = vmatpush2.bf16.msra.mxu0 0
      %923 = vmatprep.subr.bf16.mxu0 0
      %924 = vmatpush2.bf16.msra.mxu0 0
      %925 = vmatprep.subr.bf16.mxu0 0
      %926 = vmatpush2.bf16.msra.mxu0 0
      %927 = vmatprep.subr.bf16.mxu0 0
      %928 = vmatpush2.bf16.msra.mxu0 0
      %929 = vmatprep.mubr.bf16.mxu0 0
      %930 = vmatmul.mubr.bf16.gmra.mxu0 %v882
      %v931 = vpop.f32.mrf.mxu0
      %v932 = vadd.f32 %v788, %v931
      %v933 = vpop.f32.mrf.mxu0
      %v934 = vadd.f32 %v788, %v933
      %v935 = vpop.f32.mrf.mxu0
      %v936 = vpop.f32.mrf.mxu0
      %937 = vdwg.mxu0
      %938 = vmatprep.subr.bf16.mxu0 0
      %939 = vmatpush1.bf16.msra.mxu0 0
      %940 = vmatprep.subr.bf16.mxu0 0
      %941 = vmatpush1.bf16.msra.mxu0 0
      %942 = vmatprep.subr.bf16.mxu0 0
      %943 = vmatpush1.bf16.msra.mxu0 0
      %944 = vmatprep.subr.bf16.mxu0 %v895
      %945 = vmatpush1.bf16.msra.mxu0 %v892
      %946 = vmatprep.subr.bf16.mxu0 %v859
      %947 = vmatpush1.bf16.msra.mxu0 %v858
      %948 = vmatprep.subr.bf16.mxu0 %v855
      %949 = vmatpush1.bf16.msra.mxu0 %v854
      %950 = vmatprep.subr.bf16.mxu0 %v851
      %951 = vmatpush1.bf16.msra.mxu0 %v850
      %952 = vmatprep.subr.bf16.mxu0 %v847
      %953 = vmatpush1.bf16.msra.mxu0 %v846
      %954 = vmatprep.subr.bf16.mxu0 0
      %955 = vmatpush2.bf16.msra.mxu0 0
      %956 = vmatprep.subr.bf16.mxu0 0
      %957 = vmatpush2.bf16.msra.mxu0 0
      %958 = vmatprep.subr.bf16.mxu0 0
      %959 = vmatpush2.bf16.msra.mxu0 0
      %960 = vmatprep.subr.bf16.mxu0 0
      %961 = vmatpush2.bf16.msra.mxu0 0
      %962 = vmatprep.subr.bf16.mxu0 0
      %963 = vmatpush2.bf16.msra.mxu0 0
      %964 = vmatprep.subr.bf16.mxu0 0
      %965 = vmatpush2.bf16.msra.mxu0 0
      %966 = vmatprep.subr.bf16.mxu0 0
      %967 = vmatpush2.bf16.msra.mxu0 0
      %968 = vmatprep.subr.bf16.mxu0 0
      %969 = vmatpush2.bf16.msra.mxu0 0
      %970 = vmatprep.mubr.bf16.mxu0 0
      %971 = vmatmul.mubr.bf16.gmra.mxu0 %v882
      %v972 = vpop.f32.mrf.mxu0
      %v973 = vadd.f32 %v788, %v972
      %v974 = vpop.f32.mrf.mxu0
      %v975 = vadd.f32 %v788, %v974
      %v976 = vpop.f32.mrf.mxu0
      %v977 = vpop.f32.mrf.mxu0
      %978 = vdwg.mxu0
      %v979 = vmul.f32 %v932, 0.1
      %v980 = vmul.f32 %v934, 0.1
      %v981 = vmul.f32 %v973, 0.1
      %v982 = vmul.f32 %v975, 0.1
      %v983 = vmax.f32 %v932, %v979
      %v984 = vmax.f32 %v934, %v980
      %v985 = vmax.f32 %v973, %v981
      %v986 = vmax.f32 %v975, %v982
      %v987 = vld [vmem:[#allocation2] sm:$0xff]
      %v988 = vld [vmem:[#allocation2 + $0x8] sm:$0xff]
      %v991 = vcombine.high %v987, %v987
      %v992 = vcombine.high %v988, %v988
      %v995 = vadd.f32 %v983, %v987
      %v996 = vadd.f32 %v984, %v991
      %v997 = vadd.f32 %v985, %v988
      %v998 = vadd.f32 %v986, %v992
      %v999 = vsel %vm459, %v995, 0.0
      %v1000 = vsel %vm460, %v996, 0.0
      %v1001 = vsel %vm461, %v997, 0.0
      %v1002 = vsel %vm462, %v998, 0.0
      %v1007 = vcombine.low %v999, %v1000
      %v1008 = vcombine.low %v1001, %v1002
      %1011 = vst [vmem:[#allocation2] sm:$0xff] %v1007
      %1012 = vst [vmem:[#allocation2 + $0x8] sm:$0xff] %v1008
      %s1013 = scalar_lea.vmem %s4, 4
      %v1014 = vld [vmem:[%s1013] sm:$0xf]
      %v1015 = vld [vmem:[#allocation2] sm:$0xff]
      %v1016 = vld [vmem:[#allocation2 + $0x8] sm:$0xff]
      %v1019 = vcombine.high %v1015, %v1015
      %v1020 = vcombine.high %v1016, %v1016
      %v1023 = vpack.c.bf16 %v1015, %v1015
      %v1024 = vpack.c.bf16 %v1019, %v1019
      %v1025 = vpack.c.bf16 %v1016, %v1016
      %v1026 = vpack.c.bf16 %v1020, %v1020
      %s1027 = scalar_lea.vmem %s5, 8
      %v1028 = vld [vmem:[%s1027] sm:$0xff]
      %1030 = vset.pattern.permute.xlu0 0
      %1031 = vperm.xlu0 %1030, %v1028
      %v1032 = vpop.permute.xlu0 %1031
      %v1035 = vsel %vm335, %v1014, 0
      %v1038 = vsel %vm339, %v1023, 0
      %v1041 = vsel %vm339, %v1024, 0
      %v1044 = vsel %vm339, %v1025, 0
      %v1047 = vsel %vm339, %v1026, 0
      %1049 = vmatprep.subr.bf16.mxu0 0
      %1050 = vmatpush1.bf16.msra.mxu0 0
      %1051 = vmatprep.subr.bf16.mxu0 0
      %1052 = vmatpush1.bf16.msra.mxu0 0
      %1053 = vmatprep.subr.bf16.mxu0 0
      %1054 = vmatpush1.bf16.msra.mxu0 0
      %1055 = vmatprep.subr.bf16.mxu0 0
      %1056 = vmatpush1.bf16.msra.mxu0 0
      %1057 = vmatprep.subr.bf16.mxu0 0
      %1058 = vmatpush1.bf16.msra.mxu0 0
      %1059 = vmatprep.subr.bf16.mxu0 0
      %1060 = vmatpush1.bf16.msra.mxu0 0
      %1061 = vmatprep.subr.bf16.mxu0 0
      %1062 = vmatpush1.bf16.msra.mxu0 0
      %1063 = vmatprep.subr.bf16.mxu0 %v1041
      %1064 = vmatpush1.bf16.msra.mxu0 %v1038
      %1065 = vmatprep.subr.bf16.mxu0 0
      %1066 = vmatpush2.bf16.msra.mxu0 0
      %1067 = vmatprep.subr.bf16.mxu0 0
      %1068 = vmatpush2.bf16.msra.mxu0 0
      %1069 = vmatprep.subr.bf16.mxu0 0
      %1070 = vmatpush2.bf16.msra.mxu0 0
      %1071 = vmatprep.subr.bf16.mxu0 0
      %1072 = vmatpush2.bf16.msra.mxu0 0
      %1073 = vmatprep.subr.bf16.mxu0 0
      %1074 = vmatpush2.bf16.msra.mxu0 0
      %1075 = vmatprep.subr.bf16.mxu0 0
      %1076 = vmatpush2.bf16.msra.mxu0 0
      %1077 = vmatprep.subr.bf16.mxu0 0
      %1078 = vmatpush2.bf16.msra.mxu0 0
      %1079 = vmatprep.subr.bf16.mxu0 0
      %1080 = vmatpush2.bf16.msra.mxu0 0
      %1081 = vmatprep.mubr.bf16.mxu0 0
      %1082 = vmatmul.mubr.bf16.gmra.mxu0 %v1035
      %v1083 = vpop.f32.mrf.mxu0
      %v1084 = vadd.f32 %v1032, %v1083
      %v1085 = vpop.f32.mrf.mxu0
      %v1086 = vadd.f32 %v1032, %v1085
      %v1087 = vpop.f32.mrf.mxu0
      %v1088 = vpop.f32.mrf.mxu0
      %1089 = vdwg.mxu0
      %1090 = vmatprep.subr.bf16.mxu0 0
      %1091 = vmatpush1.bf16.msra.mxu0 0
      %1092 = vmatprep.subr.bf16.mxu0 0
      %1093 = vmatpush1.bf16.msra.mxu0 0
      %1094 = vmatprep.subr.bf16.mxu0 0
      %1095 = vmatpush1.bf16.msra.mxu0 0
      %1096 = vmatprep.subr.bf16.mxu0 0
      %1097 = vmatpush1.bf16.msra.mxu0 0
      %1098 = vmatprep.subr.bf16.mxu0 0
      %1099 = vmatpush1.bf16.msra.mxu0 0
      %1100 = vmatprep.subr.bf16.mxu0 0
      %1101 = vmatpush1.bf16.msra.mxu0 0
      %1102 = vmatprep.subr.bf16.mxu0 0
      %1103 = vmatpush1.bf16.msra.mxu0 0
      %1104 = vmatprep.subr.bf16.mxu0 %v1047
      %1105 = vmatpush1.bf16.msra.mxu0 %v1044
      %1106 = vmatprep.subr.bf16.mxu0 0
      %1107 = vmatpush2.bf16.msra.mxu0 0
      %1108 = vmatprep.subr.bf16.mxu0 0
      %1109 = vmatpush2.bf16.msra.mxu0 0
      %1110 = vmatprep.subr.bf16.mxu0 0
      %1111 = vmatpush2.bf16.msra.mxu0 0
      %1112 = vmatprep.subr.bf16.mxu0 0
      %1113 = vmatpush2.bf16.msra.mxu0 0
      %1114 = vmatprep.subr.bf16.mxu0 0
      %1115 = vmatpush2.bf16.msra.mxu0 0
      %1116 = vmatprep.subr.bf16.mxu0 0
      %1117 = vmatpush2.bf16.msra.mxu0 0
      %1118 = vmatprep.subr.bf16.mxu0 0
      %1119 = vmatpush2.bf16.msra.mxu0 0
      %1120 = vmatprep.subr.bf16.mxu0 0
      %1121 = vmatpush2.bf16.msra.mxu0 0
      %1122 = vmatprep.mubr.bf16.mxu0 0
      %1123 = vmatmul.mubr.bf16.gmra.mxu0 %v1035
      %v1124 = vpop.f32.mrf.mxu0
      %v1125 = vadd.f32 %v1032, %v1124
      %v1126 = vpop.f32.mrf.mxu0
      %v1127 = vadd.f32 %v1032, %v1126
      %v1128 = vpop.f32.mrf.mxu0
      %v1129 = vpop.f32.mrf.mxu0
      %1130 = vdwg.mxu0
      %v1131 = vmul.f32 %v1084, 0.1
      %v1132 = vmul.f32 %v1086, 0.1
      %v1133 = vmul.f32 %v1125, 0.1
      %v1134 = vmul.f32 %v1127, 0.1
      %v1135 = vmax.f32 %v1084, %v1131
      %v1136 = vmax.f32 %v1086, %v1132
      %v1137 = vmax.f32 %v1125, %v1133
      %v1138 = vmax.f32 %v1127, %v1134
      %v1139 = vsel %vm459, %v1135, 0.0
      %v1140 = vsel %vm460, %v1136, 0.0
      %v1141 = vsel %vm461, %v1137, 0.0
      %v1142 = vsel %vm462, %v1138, 0.0
      %v1143 = vpack.c.bf16 %v1139, %v1139
      %v1144 = vpack.c.bf16 %v1140, %v1140
      %v1145 = vpack.c.bf16 %v1141, %v1141
      %v1146 = vpack.c.bf16 %v1142, %v1142
      %v1151 = vunpack.c.l.b16 %v1143
      %v1152 = vunpack.c.l.b16 %v1144
      %v1153 = vunpack.c.l.b16 %v1145
      %v1154 = vunpack.c.l.b16 %v1146
      %v1155 = vpack.c.b16 %v1152, %v1151
      %v1156 = vpack.c.b16 %v1154, %v1153
      %1159 = vst [vmem:[#allocation3 + $0x40] sm:$0xff] %v1155
      %1160 = vst [vmem:[#allocation3 + $0x48] sm:$0xff] %v1156
      %v1161 = vld [vmem:[#allocation3 + $0x40] sm:$0xff]
      %v1162 = vld [vmem:[#allocation3 + $0x48] sm:$0xff]
      %1165 = vrot.lane.b32.xlu0 %v1161, 19
      %v1166 = vpop.permute.xlu0 %1165
      %1167 = vrot.lane.b32.xlu0 %v1162, 19
      %v1168 = vpop.permute.xlu0 %1167
      %v1169 = vrot.slane %v1166, 4
      %v1170 = vrot.slane %v1168, 4
      %v1171 = vsel %vm633, %v1169, %v1170
      %v1172 = vsel %vm635, %v1166, %v1171
      %v1173 = vsel %vm635, %v1168, %v1170
      %1176 = vst [vmem:[#allocation3 + $0x4] sm:$0xff] %v1172
      %1177 = vst.msk [vmem:[#allocation3 + $0xc] sm:$0xf] %vm641, %v1173
      %v1178 = vld [vmem:[#allocation3 + $0x40] sm:$0xff]
      %v1179 = vld [vmem:[#allocation3 + $0x48] sm:$0xff]
      %1182 = vrot.lane.b32.xlu0 %v1178, 18
      %v1183 = vpop.permute.xlu0 %1182
      %1184 = vrot.lane.b32.xlu0 %v1179, 18
      %v1185 = vpop.permute.xlu0 %1184
      %v1186 = vrot.slane %v1183, 4
      %v1187 = vrot.slane %v1185, 4
      %v1188 = vsel %vm633, %v1186, %v1187
      %v1189 = vsel %vm654, %v1183, %v1188
      %v1190 = vsel %vm654, %v1185, %v1187
      %1193 = vst [vmem:[#allocation3 + $0x14] sm:$0xff] %v1189
      %1194 = vst.msk [vmem:[#allocation3 + $0x1c] sm:$0xf] %vm641, %v1190
      %v1195 = vld [vmem:[#allocation3 + $0x40] sm:$0xff]
      %v1196 = vld [vmem:[#allocation3 + $0x48] sm:$0xff]
      %1199 = vrot.lane.b32.xlu0 %v1195, 17
      %v1200 = vpop.permute.xlu0 %1199
      %1201 = vrot.lane.b32.xlu0 %v1196, 17
      %v1202 = vpop.permute.xlu0 %1201
      %v1203 = vrot.slane %v1200, 4
      %v1204 = vrot.slane %v1202, 4
      %v1205 = vsel %vm633, %v1203, %v1204
      %v1206 = vsel %vm672, %v1200, %v1205
      %v1207 = vsel %vm672, %v1202, %v1204
      %1210 = vst [vmem:[#allocation3 + $0x24] sm:$0xff] %v1206
      %1211 = vst.msk [vmem:[#allocation3 + $0x2c] sm:$0xf] %vm641, %v1207
      %v1212 = vld [vmem:[#allocation3 + $0x40] sm:$0xff]
      %v1213 = vld [vmem:[#allocation3 + $0x48] sm:$0xff]
      %1216 = vrot.lane.b32.xlu0 %v1212, 1
      %v1217 = vpop.permute.xlu0 %1216
      %1218 = vrot.lane.b32.xlu0 %v1213, 1
      %v1219 = vpop.permute.xlu0 %1218
      %v1220 = vrot.slane %v1217, 4
      %v1221 = vrot.slane %v1219, 4
      %v1222 = vsel %vm633, %v1220, %v1221
      %v1223 = vsel %vm690, %v1217, %v1222
      %v1224 = vsel %vm690, %v1219, %v1221
      %1227 = vst [vmem:[#allocation3 + $0x34] sm:$0xff] %v1223
      %1228 = vst.msk [vmem:[#allocation3 + $0x3c] sm:$0xf] %vm641, %v1224
      %v1229 = vld [vmem:[#allocation3 + $0x44] sm:$0xff]
      %v1230 = vld [vmem:[#allocation3 + $0x4c] sm:$0xf]
      %1233 = vrot.lane.b32.xlu0 %v1229, 127
      %v1234 = vpop.permute.xlu0 %1233
      %1235 = vrot.lane.b32.xlu0 %v1230, 127
      %v1236 = vpop.permute.xlu0 %1235
      %v1237 = vrot.slane %v1234, 4
      %v1238 = vrot.slane %v1236, 4
      %v1239 = vsel %vm633, %v1237, %v1238
      %v1240 = vsel %vm708, %v1234, %v1239
      %1243 = vst [vmem:[#allocation3 + $0x54] sm:$0xff] %v1240
      %1244 = vst.msk [vmem:[#allocation3 + $0x5c] sm:$0xf] %vm641, %v1236
      %v1245 = vld [vmem:[#allocation3 + $0x44] sm:$0xff]
      %v1246 = vld [vmem:[#allocation3 + $0x4c] sm:$0xf]
      %1249 = vrot.lane.b32.xlu0 %v1245, 111
      %v1250 = vpop.permute.xlu0 %1249
      %1251 = vrot.lane.b32.xlu0 %v1246, 111
      %v1252 = vpop.permute.xlu0 %1251
      %v1253 = vrot.slane %v1250, 4
      %v1254 = vrot.slane %v1252, 4
      %v1255 = vsel %vm633, %v1253, %v1254
      %v1256 = vsel %vm725, %v1250, %v1255
      %1259 = vst [vmem:[#allocation3 + $0x64] sm:$0xff] %v1256
      %1260 = vst.msk [vmem:[#allocation3 + $0x6c] sm:$0xf] %vm641, %v1252
      %v1261 = vld [vmem:[#allocation3 + $0x44] sm:$0xff]
      %v1262 = vld [vmem:[#allocation3 + $0x4c] sm:$0xf]
      %1265 = vrot.lane.b32.xlu0 %v1261, 110
      %v1266 = vpop.permute.xlu0 %1265
      %1267 = vrot.lane.b32.xlu0 %v1262, 110
      %v1268 = vpop.permute.xlu0 %1267
      %v1269 = vrot.slane %v1266, 4
      %v1270 = vrot.slane %v1268, 4
      %v1271 = vsel %vm633, %v1269, %v1270
      %v1272 = vsel %vm742, %v1266, %v1271
      %1275 = vst [vmem:[#allocation3 + $0x74] sm:$0xff] %v1272
      %1276 = vst.msk [vmem:[#allocation3 + $0x7c] sm:$0xf] %vm641, %v1268
      %v1277 = vld [vmem:[#allocation3 + $0x44] sm:$0xff]
      %v1278 = vld [vmem:[#allocation3 + $0x4c] sm:$0xf]
      %1281 = vrot.lane.b32.xlu0 %v1277, 109
      %v1282 = vpop.permute.xlu0 %1281
      %1283 = vrot.lane.b32.xlu0 %v1278, 109
      %v1284 = vpop.permute.xlu0 %1283
      %v1285 = vrot.slane %v1282, 4
      %v1286 = vrot.slane %v1284, 4
      %v1287 = vsel %vm633, %v1285, %v1286
      %v1288 = vsel %vm759, %v1282, %v1287
      %1291 = vst [vmem:[#allocation3 + $0x84] sm:$0xff] %v1288
      %1292 = vst.msk [vmem:[#allocation3 + $0x8c] sm:$0xf] %vm641, %v1284
      %s1293 = scalar_lea.vmem %s6, 2
      %v1294 = vld [vmem:[%s1293] sm:$0x3]
      %v1295 = vld [vmem:[#allocation3] sm:$0xff]
      %v1296 = vld [vmem:[#allocation3 + $0x8] sm:$0xff]
      %v1297 = vld [vmem:[#allocation3 + $0x10] sm:$0xff]
      %v1298 = vld [vmem:[#allocation3 + $0x18] sm:$0xff]
      %v1299 = vld [vmem:[#allocation3 + $0x20] sm:$0xff]
      %v1300 = vld [vmem:[#allocation3 + $0x28] sm:$0xff]
      %v1301 = vld [vmem:[#allocation3 + $0x30] sm:$0xff]
      %v1302 = vld [vmem:[#allocation3 + $0x38] sm:$0xff]
      %v1303 = vld [vmem:[#allocation3 + $0x40] sm:$0xff]
      %v1304 = vld [vmem:[#allocation3 + $0x48] sm:$0xff]
      %v1305 = vld [vmem:[#allocation3 + $0x50] sm:$0xff]
      %v1306 = vld [vmem:[#allocation3 + $0x58] sm:$0xff]
      %v1307 = vld [vmem:[#allocation3 + $0x60] sm:$0xff]
      %v1308 = vld [vmem:[#allocation3 + $0x68] sm:$0xff]
      %v1309 = vld [vmem:[#allocation3 + $0x70] sm:$0xff]
      %v1310 = vld [vmem:[#allocation3 + $0x78] sm:$0xff]
      %v1311 = vld [vmem:[#allocation3 + $0x80] sm:$0xff]
      %v1312 = vld [vmem:[#allocation3 + $0x88] sm:$0xff]
      %s1313 = scalar_lea.vmem %s7, 4
      %v1314 = vld [vmem:[%s1313] sm:$0xf]
      %1316 = vset.pattern.permute.xlu0 0
      %1317 = vperm.xlu0 %1316, %v1314
      %v1318 = vpop.permute.xlu0 %1317
      %v1338 = vunpack.c.l.b16 %v1295
      %v1339 = vunpack.c.h.b16 %v1295
      %v1340 = vunpack.c.l.b16 %v1296
      %v1341 = vunpack.c.h.b16 %v1296
      %v1342 = vunpack.c.l.b16 %v1297
      %v1343 = vunpack.c.h.b16 %v1297
      %v1344 = vunpack.c.l.b16 %v1298
      %v1345 = vunpack.c.h.b16 %v1298
      %v1346 = vunpack.c.l.b16 %v1299
      %v1347 = vunpack.c.h.b16 %v1299
      %v1348 = vunpack.c.l.b16 %v1300
      %v1349 = vunpack.c.h.b16 %v1300
      %v1350 = vunpack.c.l.b16 %v1301
      %v1351 = vunpack.c.h.b16 %v1301
      %v1352 = vunpack.c.l.b16 %v1302
      %v1353 = vunpack.c.h.b16 %v1302
      %v1354 = vunpack.c.l.b16 %v1303
      %v1355 = vunpack.c.h.b16 %v1303
      %v1356 = vunpack.c.l.b16 %v1304
      %v1357 = vunpack.c.h.b16 %v1304
      %v1358 = vunpack.c.l.b16 %v1305
      %v1359 = vunpack.c.h.b16 %v1305
      %v1360 = vunpack.c.l.b16 %v1306
      %v1361 = vunpack.c.h.b16 %v1306
      %v1362 = vunpack.c.l.b16 %v1307
      %v1363 = vunpack.c.h.b16 %v1307
      %v1364 = vunpack.c.l.b16 %v1308
      %v1365 = vunpack.c.h.b16 %v1308
      %v1366 = vunpack.c.l.b16 %v1309
      %v1367 = vunpack.c.h.b16 %v1309
      %v1368 = vunpack.c.l.b16 %v1310
      %v1369 = vunpack.c.h.b16 %v1310
      %v1370 = vunpack.c.l.b16 %v1311
      %v1371 = vunpack.c.h.b16 %v1311
      %v1372 = vunpack.c.l.b16 %v1312
      %v1373 = vunpack.c.h.b16 %v1312
      %v1374 = vpack.c.b16 %v1342, %v1338
      %v1375 = vpack.c.b16 %v1343, %v1339
      %v1376 = vpack.c.b16 %v1344, %v1340
      %v1377 = vpack.c.b16 %v1345, %v1341
      %v1378 = vpack.c.b16 %v1350, %v1346
      %v1379 = vpack.c.b16 %v1351, %v1347
      %v1380 = vpack.c.b16 %v1352, %v1348
      %v1381 = vpack.c.b16 %v1353, %v1349
      %v1382 = vpack.c.b16 %v1358, %v1354
      %v1383 = vpack.c.b16 %v1359, %v1355
      %v1384 = vpack.c.b16 %v1360, %v1356
      %v1385 = vpack.c.b16 %v1361, %v1357
      %v1386 = vpack.c.b16 %v1366, %v1362
      %v1387 = vpack.c.b16 %v1367, %v1363
      %v1388 = vpack.c.b16 %v1368, %v1364
      %v1389 = vpack.c.b16 %v1369, %v1365
      %v1390 = vpack.c.b16 %v1370, %v1370
      %v1391 = vpack.c.b16 %v1371, %v1371
      %v1392 = vpack.c.b16 %v1372, %v1372
      %v1393 = vpack.c.b16 %v1373, %v1373
      %v1411 = vsel %vm880, %v1294, 0
      %v1414 = vsel %vm884, %v1390, 0
      %v1417 = vsel %vm884, %v1391, 0
      %v1420 = vsel %vm884, %v1392, 0
      %v1423 = vsel %vm884, %v1393, 0
      %1425 = vmatprep.subr.bf16.mxu0 0
      %1426 = vmatpush1.bf16.msra.mxu0 0
      %1427 = vmatprep.subr.bf16.mxu0 0
      %1428 = vmatpush1.bf16.msra.mxu0 0
      %1429 = vmatprep.subr.bf16.mxu0 0
      %1430 = vmatpush1.bf16.msra.mxu0 0
      %1431 = vmatprep.subr.bf16.mxu0 %v1417
      %1432 = vmatpush1.bf16.msra.mxu0 %v1414
      %1433 = vmatprep.subr.bf16.mxu0 %v1387
      %1434 = vmatpush1.bf16.msra.mxu0 %v1386
      %1435 = vmatprep.subr.bf16.mxu0 %v1383
      %1436 = vmatpush1.bf16.msra.mxu0 %v1382
      %1437 = vmatprep.subr.bf16.mxu0 %v1379
      %1438 = vmatpush1.bf16.msra.mxu0 %v1378
      %1439 = vmatprep.subr.bf16.mxu0 %v1375
      %1440 = vmatpush1.bf16.msra.mxu0 %v1374
      %1441 = vmatprep.subr.bf16.mxu0 0
      %1442 = vmatpush2.bf16.msra.mxu0 0
      %1443 = vmatprep.subr.bf16.mxu0 0
      %1444 = vmatpush2.bf16.msra.mxu0 0
      %1445 = vmatprep.subr.bf16.mxu0 0
      %1446 = vmatpush2.bf16.msra.mxu0 0
      %1447 = vmatprep.subr.bf16.mxu0 0
      %1448 = vmatpush2.bf16.msra.mxu0 0
      %1449 = vmatprep.subr.bf16.mxu0 0
      %1450 = vmatpush2.bf16.msra.mxu0 0
      %1451 = vmatprep.subr.bf16.mxu0 0
      %1452 = vmatpush2.bf16.msra.mxu0 0
      %1453 = vmatprep.subr.bf16.mxu0 0
      %1454 = vmatpush2.bf16.msra.mxu0 0
      %1455 = vmatprep.subr.bf16.mxu0 0
      %1456 = vmatpush2.bf16.msra.mxu0 0
      %1457 = vmatprep.mubr.bf16.mxu0 0
      %1458 = vmatmul.mubr.bf16.gmra.mxu0 %v1411
      %v1459 = vpop.f32.mrf.mxu0
      %v1460 = vadd.f32 %v1318, %v1459
      %v1461 = vpop.f32.mrf.mxu0
      %v1462 = vadd.f32 %v1318, %v1461
      %v1463 = vpop.f32.mrf.mxu0
      %v1464 = vpop.f32.mrf.mxu0
      %1465 = vdwg.mxu0
      %1466 = vmatprep.subr.bf16.mxu0 0
      %1467 = vmatpush1.bf16.msra.mxu0 0
      %1468 = vmatprep.subr.bf16.mxu0 0
      %1469 = vmatpush1.bf16.msra.mxu0 0
      %1470 = vmatprep.subr.bf16.mxu0 0
      %1471 = vmatpush1.bf16.msra.mxu0 0
      %1472 = vmatprep.subr.bf16.mxu0 %v1423
      %1473 = vmatpush1.bf16.msra.mxu0 %v1420
      %1474 = vmatprep.subr.bf16.mxu0 %v1389
      %1475 = vmatpush1.bf16.msra.mxu0 %v1388
      %1476 = vmatprep.subr.bf16.mxu0 %v1385
      %1477 = vmatpush1.bf16.msra.mxu0 %v1384
      %1478 = vmatprep.subr.bf16.mxu0 %v1381
      %1479 = vmatpush1.bf16.msra.mxu0 %v1380
      %1480 = vmatprep.subr.bf16.mxu0 %v1377
      %1481 = vmatpush1.bf16.msra.mxu0 %v1376
      %1482 = vmatprep.subr.bf16.mxu0 0
      %1483 = vmatpush2.bf16.msra.mxu0 0
      %1484 = vmatprep.subr.bf16.mxu0 0
      %1485 = vmatpush2.bf16.msra.mxu0 0
      %1486 = vmatprep.subr.bf16.mxu0 0
      %1487 = vmatpush2.bf16.msra.mxu0 0
      %1488 = vmatprep.subr.bf16.mxu0 0
      %1489 = vmatpush2.bf16.msra.mxu0 0
      %1490 = vmatprep.subr.bf16.mxu0 0
      %1491 = vmatpush2.bf16.msra.mxu0 0
      %1492 = vmatprep.subr.bf16.mxu0 0
      %1493 = vmatpush2.bf16.msra.mxu0 0
      %1494 = vmatprep.subr.bf16.mxu0 0
      %1495 = vmatpush2.bf16.msra.mxu0 0
      %1496 = vmatprep.subr.bf16.mxu0 0
      %1497 = vmatpush2.bf16.msra.mxu0 0
      %1498 = vmatprep.mubr.bf16.mxu0 0
      %1499 = vmatmul.mubr.bf16.gmra.mxu0 %v1411
      %v1500 = vpop.f32.mrf.mxu0
      %v1501 = vadd.f32 %v1318, %v1500
      %v1502 = vpop.f32.mrf.mxu0
      %v1503 = vadd.f32 %v1318, %v1502
      %v1504 = vpop.f32.mrf.mxu0
      %v1505 = vpop.f32.mrf.mxu0
      %1506 = vdwg.mxu0
      %v1507 = vmul.f32 %v1460, 0.1
      %v1508 = vmul.f32 %v1462, 0.1
      %v1509 = vmul.f32 %v1501, 0.1
      %v1510 = vmul.f32 %v1503, 0.1
      %v1511 = vmax.f32 %v1460, %v1507
      %v1512 = vmax.f32 %v1462, %v1508
      %v1513 = vmax.f32 %v1501, %v1509
      %v1514 = vmax.f32 %v1503, %v1510
      %v1515 = vld [vmem:[#allocation2] sm:$0xff]
      %v1516 = vld [vmem:[#allocation2 + $0x8] sm:$0xff]
      %v1519 = vcombine.high %v1515, %v1515
      %v1520 = vcombine.high %v1516, %v1516
      %v1523 = vadd.f32 %v1511, %v1515
      %v1524 = vadd.f32 %v1512, %v1519
      %v1525 = vadd.f32 %v1513, %v1516
      %v1526 = vadd.f32 %v1514, %v1520
      %v1527 = vsel %vm459, %v1523, 0.0
      %v1528 = vsel %vm460, %v1524, 0.0
      %v1529 = vsel %vm461, %v1525, 0.0
      %v1530 = vsel %vm462, %v1526, 0.0
      %v1535 = vcombine.low %v1527, %v1528
      %v1536 = vcombine.low %v1529, %v1530
      %1539 = vst [vmem:[#allocation2] sm:$0xff] %v1535
      %1540 = vst [vmem:[#allocation2 + $0x8] sm:$0xff] %v1536
      %v1541 = vld [vmem:[#allocation2] sm:$0xff]
      %v1542 = vld [vmem:[#allocation2 + $0x8] sm:$0xff]
      %v1545 = vcombine.high %v1541, %v1541
      %v1546 = vcombine.high %v1542, %v1542
      %v1549 = vpack.c.bf16 %v1541, %v1541
      %v1550 = vpack.c.bf16 %v1545, %v1545
      %v1551 = vpack.c.bf16 %v1542, %v1542
      %v1552 = vpack.c.bf16 %v1546, %v1546
      %v1557 = vcombine.low %v1549, %v1550
      %v1558 = vcombine.low %v1551, %v1552
      %v1560 = vunpack.c.l.s4 1983009808
      %v1561 = vunpack.c.0.s8 %v1560
      %v1562 = vlaneseq
      %v1563 = vshrl.u32 %v1562, 7
      %v1564 = vsub.s32 %v1561, %v1563
      %v1565 = vrot.slane %v1557, %v1564
      %v1567 = vunpack.c.l.s4 1983009808
      %v1568 = vunpack.c.0.s8 %v1567
      %v1569 = vlaneseq
      %v1570 = vshrl.u32 %v1569, 7
      %v1571 = vsub.s32 %v1568, %v1570
      %v1572 = vrot.slane %v1558, %v1571
      %v1573 = vcombine.low %v1565, %v1572
      %1575 = vst [vmem:[%s305] sm:$0xff] %v1573
      %p1576 = scmp.lt.s32.totalorder %s19, 1
      %s1577 = scalar_select %p1576, %s19, 1
      %s1578 = smul.addr %s1577, 4
      %s1579 = smul.addr %s1578, 2
      %s1580 = scalar_lea.vmem %s8, %s1579
      // Predicated region
      $region53: #{bottleneck_csp_forward.2} parent=51 // pred_check
        %p1581 = pneg %p210
      $region54: #{bottleneck_csp_forward.2} parent=51 // pred_check_branch
        %1583 = sbr.rel (%p1581) target = $region56
      $region55: #{bottleneck_csp_forward.2} parent=51 // pred_region
        _
      $region56: #{bottleneck_csp_forward.2} parent=51 // pred_fallthru
        _
    $region52: #{bottleneck_csp_forward.2} parent=5 // pred_fallthru
      _
    %p1584 = scmp.le.s32.totalorder 2, %s14
    // Predicated region
    $region57: #{bottleneck_csp_forward.2} parent=5 // pred_check
      %p1585 = pneg %p1584
    $region58: #{bottleneck_csp_forward.2} parent=5 // pred_check_branch
      %1587 = sbr.rel (%p1585) target = $region60
    $region59: #{bottleneck_csp_forward.2} parent=5 // pred_region
      %s1588 = ssub.s32 %s14, 2
      // Predicated region
      $region61: #{bottleneck_csp_forward.2} parent=59 // pred_check
        %p1589 = pneg %p216
      $region62: #{bottleneck_csp_forward.2} parent=59 // pred_check_branch
        %1591 = sbr.rel (%p1589) target = $region64
      $region63: #{bottleneck_csp_forward.2} parent=59 // pred_region
        %p1592 = scmp.lt.s32.totalorder %s20, 1
        %s1593 = scalar_select %p1592, %s20, 1
        %s1594 = smul.addr %s1593, 4
        %s1595 = smul.addr %s1594, 2
        %s1596 = scalar_lea.vmem %s8, %s1595
      $region64: #{bottleneck_csp_forward.2} parent=59 // pred_fallthru
        _
    $region60: #{bottleneck_csp_forward.2} parent=5 // pred_fallthru
      _
  $region6: #{bottleneck_csp_forward.2} parent=0 // loop_footer
    %s18 = sadd.s32 1, %s14
  $region7: #{bottleneck_csp_forward.2} parent=0 // loop_footer_branch
    %13 = sbr.rel target = $region3
  $region8: #{bottleneck_csp_forward.2} parent=0 // loop_exit
    _

</llo_original>
